<compile_context>
chip_gen: v7x
topology: tpu7x:2x2x1
jax: 0.10.0
libtpu: 0.0.40
codegen_flags: <defaults>
</compile_context>

<pallas_src>
import jax
import jax.numpy as jnp
from jax import lax
from jax.experimental import pallas as pl
from jax.experimental.pallas import tpu as pltpu

# Model / problem sizes (consistent with the module's forward)
BATCH = 2
SEQ = 8
IN_FEATURES = 10
HIDDEN = 32          # hidden_size (TPU-friendly: 4H = 128 = one lane tile)
NUM_LAYERS = 2       # stacked LSTM layers
OUT_FEATURES = 1
BP = 8               # batch padded to one full f32 sublane group


def lstm_model_kernel(x_ref,           # (S*BP, F)  bf16  time-major, batch-padded
                      w_ih0_ref,       # (F, 4H)    bf16  gate-pre-scaled
                      b0_ref,          # (1, 4H)    f32   (b_ih0+b_hh0), gate-pre-scaled
                      w_hh0_ref,       # (H, 4H)    bf16  gate-pre-scaled
                      w_ih1_ref,       # (H, 4H)    bf16  gate-pre-scaled
                      w_hh1_ref,       # (H, 4H)    bf16  gate-pre-scaled
                      b1_ref,          # (1, 4H)    f32   (b_ih1+b_hh1), gate-pre-scaled
                      w_out_lstm_ref,  # (H, 1)     bf16  output_linear[:, :H]
                      w_mlp_fold_ref,  # (F, 1)     bf16  w_lin.T @ output_linear[:, H:].T
                      b_out_ref,       # (1, 1)     f32   b_out + b_lin @ w_out_mlp
                      out_ref):        # (BP, 1)    f32
    H = HIDDEN
    S = SEQ

    # ---- Hoisted layer-0 input projection (one matmul off the serial path).
    # Weights/biases arrive pre-scaled by the per-gate factor [0.5,0.5,1,0.5]
    # so the sigmoid-from-tanh identity needs no per-step scaling.
    gx0 = (jnp.dot(x_ref[...], w_ih0_ref[...],
                   preferred_element_type=jnp.float32)
           + b0_ref[...])                                        # (S*BP, 4H) f32

    # ---- mlp branch of the epilogue: independent of the recurrence, so it is
    # computed up front and stays entirely off the critical path.
    x_last = x_ref[(S - 1) * BP:S * BP, :]                       # (BP, F) bf16
    mlp_part = (jnp.dot(x_last, w_mlp_fold_ref[...],
                        preferred_element_type=jnp.float32)
                + b_out_ref[...])                                # (BP, 1) f32

    w_hh0 = w_hh0_ref[...]
    w_ih1 = w_ih1_ref[...]
    w_hh1 = w_hh1_ref[...]
    b1 = b1_ref[...]

    def gate_math(gates, c):
        # `gates` is pre-scaled: sigmoid quarters hold x/2, tanh quarter holds x.
        # sigmoid(x) = 0.5*tanh(x/2) + 0.5  ->  ONE full-width EUP tanh pass,
        # then a cheap VPU affine fix-up on the sigmoid quarters.
        t = jnp.tanh(gates)                                      # (BP, 4H) f32
        i = t[:, 0:H] * 0.5 + 0.5
        f = t[:, H:2 * H] * 0.5 + 0.5
        g = t[:, 2 * H:3 * H]
        o = t[:, 3 * H:4 * H] * 0.5 + 0.5
        c_new = f * c + i * g                                    # c stays f32
        h_new = (o * jnp.tanh(c_new)).astype(jnp.bfloat16)       # h stays bf16
        return h_new, c_new

    h0 = jnp.zeros((BP, H), jnp.bfloat16)
    h1 = jnp.zeros((BP, H), jnp.bfloat16)
    c0 = jnp.zeros((BP, H), jnp.float32)
    c1 = jnp.zeros((BP, H), jnp.float32)

    # ---- Wavefront-fused, fully unrolled recurrence: layer-1 step t consumes
    # h0_t immediately, so layer-1 step t overlaps with layer-0 step t+1 and
    # the dependent-matmul chain is 8 (layer 0) + 1 (last layer-1 step) + 1
    # (epilogue) instead of 8 + 1 + 8 + 1.
    for t in range(S):
        # Layer 0, step t: a single recurrent matmul on the serial chain.
        gates0 = gx0[t * BP:(t + 1) * BP, :] + jnp.dot(
            h0, w_hh0, preferred_element_type=jnp.float32)       # (BP, 4H)
        h0, c0 = gate_math(gates0, c0)

        # Layer 1, step t: two small independent dots.  Only the h0_t dot is
        # on the critical path; the h1_{t-1} dot was issuable one step ago.
        gates1 = (b1
                  + jnp.dot(h0, w_ih1, preferred_element_type=jnp.float32)
                  + jnp.dot(h1, w_hh1, preferred_element_type=jnp.float32))
        h1, c1 = gate_math(gates1, c1)

    # ---- Epilogue: only the h1-dependent dot remains after the loop.
    out = (jnp.dot(h1, w_out_lstm_ref[...],
                   preferred_element_type=jnp.float32)
           + mlp_part)                                           # (BP, 1)
    out_ref[...] = out.astype(out_ref.dtype)


def lstm_model_parallel(x, p):
    """x: (B, S, F) float32, like the PyTorch batch_first module."""
    B, S, F = x.shape
    H = HIDDEN

    # Time-major + pad batch to one full sublane group, flatten time into rows
    # so the hoisted projection is a single matmul and each per-step access is
    # a static, sublane-aligned slice.
    x_tm = jnp.transpose(x, (1, 0, 2)).astype(jnp.float32)            # (S, B, F)
    x_pad = jnp.zeros((S, BP, F), jnp.float32).at[:, :B, :].set(x_tm)
    x_flat = x_pad.reshape(S * BP, F).astype(jnp.bfloat16)            # (S*BP, F)

    # Per-gate pre-scale for sigmoid(x) = 0.5*tanh(x/2)+0.5 (PyTorch gate
    # order [i, f, g, o]; only g keeps scale 1.0).  0.5 is a power of two, so
    # scaling before the bf16 cast is exact.
    gate_scale = jnp.concatenate([
        jnp.full((H,), 0.5, jnp.float32),
        jnp.full((H,), 0.5, jnp.float32),
        jnp.ones((H,), jnp.float32),
        jnp.full((H,), 0.5, jnp.float32)])                             # (4H,)

    # Algebraic fold of the mlp branch: linear -> output_linear[:, H:] has no
    # nonlinearity in between, so it collapses to one (F, 1) column + bias.
    w_out_lstm = p["w_out"][:, :H].T                                   # (H, 1)
    w_out_mlp = p["w_out"][:, H:].T                                    # (H, 1)
    w_mlp_fold = p["w_lin"].T @ w_out_mlp                              # (F, 1)
    b_out_fold = (p["b_out"] + p["b_lin"] @ w_out_mlp).reshape(1, 1)   # (1, 1)

    args = (
        x_flat,
        (p["w_ih0"].T * gate_scale).astype(jnp.bfloat16),
        ((p["b_ih0"] + p["b_hh0"]) * gate_scale).reshape(1, 4 * H).astype(jnp.float32),
        (p["w_hh0"].T * gate_scale).astype(jnp.bfloat16),
        (p["w_ih1"].T * gate_scale).astype(jnp.bfloat16),
        (p["w_hh1"].T * gate_scale).astype(jnp.bfloat16),
        ((p["b_ih1"] + p["b_hh1"]) * gate_scale).reshape(1, 4 * H).astype(jnp.float32),
        w_out_lstm.astype(jnp.bfloat16),
        w_mlp_fold.astype(jnp.bfloat16),
        b_out_fold.astype(jnp.float32),
    )

    # Advisory cost so XLA schedules this tiny custom call sensibly.
    cost = pl.CostEstimate(flops=1_740_000, transcendentals=20_480,
                           bytes_accessed=29_600)

    vmem = pl.BlockSpec(memory_space=pltpu.MemorySpace.VMEM)
    out_pad = pl.pallas_call(
        lstm_model_kernel,
        out_shape=jax.ShapeDtypeStruct((BP, OUT_FEATURES), jnp.float32),
        in_specs=[vmem] * len(args),
        out_specs=vmem,
        cost_estimate=cost,
    )(*args)
    return out_pad[:B]                # drop the padded batch rows


def init_params(key):
    """Deterministic PyTorch-style uniform init (shapes from nn.LSTM / nn.Linear)."""
    ks = jax.random.split(key, 12)

    def u(k, shape, bound):
        return jax.random.uniform(k, shape, jnp.float32, -bound, bound)

    kl = 1.0 / (HIDDEN ** 0.5)            # LSTM init bound
    km = 1.0 / (IN_FEATURES ** 0.5)       # linear init bound
    ko = 1.0 / ((2 * HIDDEN) ** 0.5)      # output_linear init bound
    return {
        "w_ih0": u(ks[0], (4 * HIDDEN, IN_FEATURES), kl),
        "w_hh0": u(ks[1], (4 * HIDDEN, HIDDEN), kl),
        "b_ih0": u(ks[2], (4 * HIDDEN,), kl),
        "b_hh0": u(ks[3], (4 * HIDDEN,), kl),
        "w_ih1": u(ks[4], (4 * HIDDEN, HIDDEN), kl),
        "w_hh1": u(ks[5], (4 * HIDDEN, HIDDEN), kl),
        "b_ih1": u(ks[6], (4 * HIDDEN,), kl),
        "b_hh1": u(ks[7], (4 * HIDDEN,), kl),
        "w_lin": u(ks[8], (HIDDEN, IN_FEATURES), km),
        "b_lin": u(ks[9], (HIDDEN,), km),
        "w_out": u(ks[10], (OUT_FEATURES, 2 * HIDDEN), ko),
        "b_out": u(ks[11], (OUT_FEATURES,), ko),
    }


def ref_forward(x, p):
    """Pure-JAX reference reproducing the PyTorch forward (f32, HIGHEST precision)."""
    B, S, F = x.shape
    hp = lax.Precision.HIGHEST

    def lstm_layer(inputs, w_ih, w_hh, b_ih, b_hh):
        H = w_hh.shape[1]

        def step(carry, x_t):
            h, c = carry
            gates = (jnp.dot(x_t, w_ih.T, precision=hp)
                     + jnp.dot(h, w_hh.T, precision=hp) + b_ih + b_hh)
            i, f, g, o = jnp.split(gates, 4, axis=-1)
            i = jax.nn.sigmoid(i)
            f = jax.nn.sigmoid(f)
            g = jnp.tanh(g)
            o = jax.nn.sigmoid(o)
            c = f * c + i * g
            h = o * jnp.tanh(c)
            return (h, c), h

        h0 = jnp.zeros((B, H), jnp.float32)
        (_, _), hs = lax.scan(step, (h0, h0), jnp.transpose(inputs, (1, 0, 2)))
        return jnp.transpose(hs, (1, 0, 2))

    h = lstm_layer(x, p["w_ih0"], p["w_hh0"], p["b_ih0"], p["b_hh0"])
    h = lstm_layer(h, p["w_ih1"], p["w_hh1"], p["b_ih1"], p["b_hh1"])
    lstm_out = h[:, -1, :]
    mlp = jnp.dot(x[:, -1, :], p["w_lin"].T, precision=hp) + p["b_lin"]
    comb = jnp.concatenate([lstm_out, mlp], axis=1)
    return jnp.dot(comb, p["w_out"].T, precision=hp) + p["b_out"]


if __name__ == "__main__":
    key = jax.random.PRNGKey(0)
    k_param, k_x = jax.random.split(key)
    params = init_params(k_param)
    x = jax.random.normal(k_x, (BATCH, SEQ, IN_FEATURES), jnp.float32)

    out = jax.block_until_ready(lstm_model_parallel(x, params))
    ref = jax.block_until_ready(ref_forward(x, params))

    assert out.shape == (BATCH, OUT_FEATURES), out.shape
    # bf16 MXU inputs (f32 accumulation) + the sigmoid-from-tanh identity
    # through a 2-layer, 8-step recurrence: allow a few e-3 of drift vs. the
    # f32 HIGHEST-precision reference.
    assert jnp.allclose(out, ref, atol=2e-2, rtol=2e-2), (out, ref)
    print("KERNEL_OK")
</pallas_src>

<mosaic_0001>
module attributes {stable_mosaic.version = 11 : i64} {
  func.func @lstm_model_kernel(%arg0: memref<64x10xbf16, #tpu.memory_space<vmem>>, %arg1: memref<10x128xbf16, #tpu.memory_space<vmem>>, %arg2: memref<1x128xf32, #tpu.memory_space<vmem>>, %arg3: memref<32x128xbf16, #tpu.memory_space<vmem>>, %arg4: memref<32x128xbf16, #tpu.memory_space<vmem>>, %arg5: memref<32x128xbf16, #tpu.memory_space<vmem>>, %arg6: memref<1x128xf32, #tpu.memory_space<vmem>>, %arg7: memref<32x1xbf16, #tpu.memory_space<vmem>>, %arg8: memref<10x1xbf16, #tpu.memory_space<vmem>>, %arg9: memref<1x1xf32, #tpu.memory_space<vmem>>, %arg10: memref<8x1xf32, #tpu.memory_space<vmem>>) attributes {dimension_semantics = [], scalar_prefetch = 0 : i64, scratch_operands = 0 : i64, tpu.core_type = #tpu.core_type<tc>} {
    %c0 = arith.constant 0 : index
    %c0_0 = arith.constant 0 : index
    %0 = vector.load %arg0[%c0, %c0_0] : memref<64x10xbf16, #tpu.memory_space<vmem>>, vector<64x10xbf16>
    %c0_1 = arith.constant 0 : index
    %c0_2 = arith.constant 0 : index
    %1 = vector.load %arg1[%c0_1, %c0_2] : memref<10x128xbf16, #tpu.memory_space<vmem>>, vector<10x128xbf16>
    %cst = arith.constant dense<0.000000e+00> : vector<64x128xf32>
    %2 = tpu.matmul %0, %1, %cst {dimension_numbers = #tpu.dot_dimension_numbers<[1], [0], [0], [1], [0, 0, 1, 1], [], []>} : vector<64x10xbf16>, vector<10x128xbf16>, vector<64x128xf32> -> vector<64x128xf32>
    %c0_3 = arith.constant 0 : index
    %c0_4 = arith.constant 0 : index
    %3 = vector.load %arg2[%c0_3, %c0_4] : memref<1x128xf32, #tpu.memory_space<vmem>>, vector<1x128xf32>
    %4 = vector.broadcast %3 : vector<1x128xf32> to vector<64x128xf32>
    %5 = arith.addf %2, %4 : vector<64x128xf32>
    %c56 = arith.constant 56 : index
    %c0_5 = arith.constant 0 : index
    %6 = vector.load %arg0[%c56, %c0_5] : memref<64x10xbf16, #tpu.memory_space<vmem>>, vector<8x10xbf16>
    %c0_6 = arith.constant 0 : index
    %c0_7 = arith.constant 0 : index
    %7 = vector.load %arg8[%c0_6, %c0_7] : memref<10x1xbf16, #tpu.memory_space<vmem>>, vector<10x1xbf16>
    %cst_8 = arith.constant dense<0.000000e+00> : vector<8x1xf32>
    %8 = tpu.matmul %6, %7, %cst_8 {dimension_numbers = #tpu.dot_dimension_numbers<[1], [0], [0], [1], [0, 0, 1, 1], [], []>} : vector<8x10xbf16>, vector<10x1xbf16>, vector<8x1xf32> -> vector<8x1xf32>
    %c0_9 = arith.constant 0 : index
    %c0_10 = arith.constant 0 : index
    %9 = vector.load %arg9[%c0_9, %c0_10] : memref<1x1xf32, #tpu.memory_space<vmem>>, vector<1x1xf32>
    %10 = vector.broadcast %9 : vector<1x1xf32> to vector<8x1xf32>
    %11 = arith.addf %8, %10 : vector<8x1xf32>
    %c0_11 = arith.constant 0 : index
    %c0_12 = arith.constant 0 : index
    %12 = vector.load %arg3[%c0_11, %c0_12] : memref<32x128xbf16, #tpu.memory_space<vmem>>, vector<32x128xbf16>
    %c0_13 = arith.constant 0 : index
    %c0_14 = arith.constant 0 : index
    %13 = vector.load %arg4[%c0_13, %c0_14] : memref<32x128xbf16, #tpu.memory_space<vmem>>, vector<32x128xbf16>
    %c0_15 = arith.constant 0 : index
    %c0_16 = arith.constant 0 : index
    %14 = vector.load %arg5[%c0_15, %c0_16] : memref<32x128xbf16, #tpu.memory_space<vmem>>, vector<32x128xbf16>
    %c0_17 = arith.constant 0 : index
    %c0_18 = arith.constant 0 : index
    %15 = vector.load %arg6[%c0_17, %c0_18] : memref<1x128xf32, #tpu.memory_space<vmem>>, vector<1x128xf32>
    %cst_19 = arith.constant 0.000000e+00 : bf16
    %16 = vector.broadcast %cst_19 : bf16 to vector<8x32xbf16>
    %cst_20 = arith.constant 0.000000e+00 : bf16
    %17 = vector.broadcast %cst_20 : bf16 to vector<8x32xbf16>
    %cst_21 = arith.constant 0.000000e+00 : f32
    %18 = vector.broadcast %cst_21 : f32 to vector<8x32xf32>
    %cst_22 = arith.constant 0.000000e+00 : f32
    %19 = vector.broadcast %cst_22 : f32 to vector<8x32xf32>
    %20 = vector.extract_strided_slice %5 {offsets = [0, 0], sizes = [8, 128], strides = [1, 1]} : vector<64x128xf32> to vector<8x128xf32>
    %cst_23 = arith.constant dense<0.000000e+00> : vector<8x128xf32>
    %21 = tpu.matmul %16, %12, %cst_23 {dimension_numbers = #tpu.dot_dimension_numbers<[1], [0], [0], [1], [0, 0, 1, 1], [], []>} : vector<8x32xbf16>, vector<32x128xbf16>, vector<8x128xf32> -> vector<8x128xf32>
    %22 = arith.addf %20, %21 : vector<8x128xf32>
    %23 = math.tanh %22 : vector<8x128xf32>
    %24 = vector.extract_strided_slice %23 {offsets = [0, 0], sizes = [8, 32], strides = [1, 1]} : vector<8x128xf32> to vector<8x32xf32>
    %cst_24 = arith.constant 5.000000e-01 : f32
    %25 = vector.broadcast %cst_24 : f32 to vector<8x32xf32>
    %26 = arith.mulf %24, %25 : vector<8x32xf32>
    %cst_25 = arith.constant 5.000000e-01 : f32
    %27 = vector.broadcast %cst_25 : f32 to vector<8x32xf32>
    %28 = arith.addf %26, %27 : vector<8x32xf32>
    %29 = vector.extract_strided_slice %23 {offsets = [0, 32], sizes = [8, 32], strides = [1, 1]} : vector<8x128xf32> to vector<8x32xf32>
    %cst_26 = arith.constant 5.000000e-01 : f32
    %30 = vector.broadcast %cst_26 : f32 to vector<8x32xf32>
    %31 = arith.mulf %29, %30 : vector<8x32xf32>
    %cst_27 = arith.constant 5.000000e-01 : f32
    %32 = vector.broadcast %cst_27 : f32 to vector<8x32xf32>
    %33 = arith.addf %31, %32 : vector<8x32xf32>
    %34 = vector.extract_strided_slice %23 {offsets = [0, 64], sizes = [8, 32], strides = [1, 1]} : vector<8x128xf32> to vector<8x32xf32>
    %35 = vector.extract_strided_slice %23 {offsets = [0, 96], sizes = [8, 32], strides = [1, 1]} : vector<8x128xf32> to vector<8x32xf32>
    %cst_28 = arith.constant 5.000000e-01 : f32
    %36 = vector.broadcast %cst_28 : f32 to vector<8x32xf32>
    %37 = arith.mulf %35, %36 : vector<8x32xf32>
    %cst_29 = arith.constant 5.000000e-01 : f32
    %38 = vector.broadcast %cst_29 : f32 to vector<8x32xf32>
    %39 = arith.addf %37, %38 : vector<8x32xf32>
    %40 = arith.mulf %33, %18 : vector<8x32xf32>
    %41 = arith.mulf %28, %34 : vector<8x32xf32>
    %42 = arith.addf %40, %41 : vector<8x32xf32>
    %43 = math.tanh %42 : vector<8x32xf32>
    %44 = arith.mulf %39, %43 : vector<8x32xf32>
    %45 = arith.truncf %44 : vector<8x32xf32> to vector<8x32xbf16>
    %cst_30 = arith.constant dense<0.000000e+00> : vector<8x128xf32>
    %46 = tpu.matmul %45, %13, %cst_30 {dimension_numbers = #tpu.dot_dimension_numbers<[1], [0], [0], [1], [0, 0, 1, 1], [], []>} : vector<8x32xbf16>, vector<32x128xbf16>, vector<8x128xf32> -> vector<8x128xf32>
    %47 = vector.broadcast %15 : vector<1x128xf32> to vector<8x128xf32>
    %48 = arith.addf %47, %46 : vector<8x128xf32>
    %cst_31 = arith.constant dense<0.000000e+00> : vector<8x128xf32>
    %49 = tpu.matmul %17, %14, %cst_31 {dimension_numbers = #tpu.dot_dimension_numbers<[1], [0], [0], [1], [0, 0, 1, 1], [], []>} : vector<8x32xbf16>, vector<32x128xbf16>, vector<8x128xf32> -> vector<8x128xf32>
    %50 = arith.addf %48, %49 : vector<8x128xf32>
    %51 = math.tanh %50 : vector<8x128xf32>
    %52 = vector.extract_strided_slice %51 {offsets = [0, 0], sizes = [8, 32], strides = [1, 1]} : vector<8x128xf32> to vector<8x32xf32>
    %cst_32 = arith.constant 5.000000e-01 : f32
    %53 = vector.broadcast %cst_32 : f32 to vector<8x32xf32>
    %54 = arith.mulf %52, %53 : vector<8x32xf32>
    %cst_33 = arith.constant 5.000000e-01 : f32
    %55 = vector.broadcast %cst_33 : f32 to vector<8x32xf32>
    %56 = arith.addf %54, %55 : vector<8x32xf32>
    %57 = vector.extract_strided_slice %51 {offsets = [0, 32], sizes = [8, 32], strides = [1, 1]} : vector<8x128xf32> to vector<8x32xf32>
    %cst_34 = arith.constant 5.000000e-01 : f32
    %58 = vector.broadcast %cst_34 : f32 to vector<8x32xf32>
    %59 = arith.mulf %57, %58 : vector<8x32xf32>
    %cst_35 = arith.constant 5.000000e-01 : f32
    %60 = vector.broadcast %cst_35 : f32 to vector<8x32xf32>
    %61 = arith.addf %59, %60 : vector<8x32xf32>
    %62 = vector.extract_strided_slice %51 {offsets = [0, 64], sizes = [8, 32], strides = [1, 1]} : vector<8x128xf32> to vector<8x32xf32>
    %63 = vector.extract_strided_slice %51 {offsets = [0, 96], sizes = [8, 32], strides = [1, 1]} : vector<8x128xf32> to vector<8x32xf32>
    %cst_36 = arith.constant 5.000000e-01 : f32
    %64 = vector.broadcast %cst_36 : f32 to vector<8x32xf32>
    %65 = arith.mulf %63, %64 : vector<8x32xf32>
    %cst_37 = arith.constant 5.000000e-01 : f32
    %66 = vector.broadcast %cst_37 : f32 to vector<8x32xf32>
    %67 = arith.addf %65, %66 : vector<8x32xf32>
    %68 = arith.mulf %61, %19 : vector<8x32xf32>
    %69 = arith.mulf %56, %62 : vector<8x32xf32>
    %70 = arith.addf %68, %69 : vector<8x32xf32>
    %71 = math.tanh %70 : vector<8x32xf32>
    %72 = arith.mulf %67, %71 : vector<8x32xf32>
    %73 = arith.truncf %72 : vector<8x32xf32> to vector<8x32xbf16>
    %74 = vector.extract_strided_slice %5 {offsets = [8, 0], sizes = [8, 128], strides = [1, 1]} : vector<64x128xf32> to vector<8x128xf32>
    %cst_38 = arith.constant dense<0.000000e+00> : vector<8x128xf32>
    %75 = tpu.matmul %45, %12, %cst_38 {dimension_numbers = #tpu.dot_dimension_numbers<[1], [0], [0], [1], [0, 0, 1, 1], [], []>} : vector<8x32xbf16>, vector<32x128xbf16>, vector<8x128xf32> -> vector<8x128xf32>
    %76 = arith.addf %74, %75 : vector<8x128xf32>
    %77 = math.tanh %76 : vector<8x128xf32>
    %78 = vector.extract_strided_slice %77 {offsets = [0, 0], sizes = [8, 32], strides = [1, 1]} : vector<8x128xf32> to vector<8x32xf32>
    %cst_39 = arith.constant 5.000000e-01 : f32
    %79 = vector.broadcast %cst_39 : f32 to vector<8x32xf32>
    %80 = arith.mulf %78, %79 : vector<8x32xf32>
    %cst_40 = arith.constant 5.000000e-01 : f32
    %81 = vector.broadcast %cst_40 : f32 to vector<8x32xf32>
    %82 = arith.addf %80, %81 : vector<8x32xf32>
    %83 = vector.extract_strided_slice %77 {offsets = [0, 32], sizes = [8, 32], strides = [1, 1]} : vector<8x128xf32> to vector<8x32xf32>
    %cst_41 = arith.constant 5.000000e-01 : f32
    %84 = vector.broadcast %cst_41 : f32 to vector<8x32xf32>
    %85 = arith.mulf %83, %84 : vector<8x32xf32>
    %cst_42 = arith.constant 5.000000e-01 : f32
    %86 = vector.broadcast %cst_42 : f32 to vector<8x32xf32>
    %87 = arith.addf %85, %86 : vector<8x32xf32>
    %88 = vector.extract_strided_slice %77 {offsets = [0, 64], sizes = [8, 32], strides = [1, 1]} : vector<8x128xf32> to vector<8x32xf32>
    %89 = vector.extract_strided_slice %77 {offsets = [0, 96], sizes = [8, 32], strides = [1, 1]} : vector<8x128xf32> to vector<8x32xf32>
    %cst_43 = arith.constant 5.000000e-01 : f32
    %90 = vector.broadcast %cst_43 : f32 to vector<8x32xf32>
    %91 = arith.mulf %89, %90 : vector<8x32xf32>
    %cst_44 = arith.constant 5.000000e-01 : f32
    %92 = vector.broadcast %cst_44 : f32 to vector<8x32xf32>
    %93 = arith.addf %91, %92 : vector<8x32xf32>
    %94 = arith.mulf %87, %42 : vector<8x32xf32>
    %95 = arith.mulf %82, %88 : vector<8x32xf32>
    %96 = arith.addf %94, %95 : vector<8x32xf32>
    %97 = math.tanh %96 : vector<8x32xf32>
    %98 = arith.mulf %93, %97 : vector<8x32xf32>
    %99 = arith.truncf %98 : vector<8x32xf32> to vector<8x32xbf16>
    %cst_45 = arith.constant dense<0.000000e+00> : vector<8x128xf32>
    %100 = tpu.matmul %99, %13, %cst_45 {dimension_numbers = #tpu.dot_dimension_numbers<[1], [0], [0], [1], [0, 0, 1, 1], [], []>} : vector<8x32xbf16>, vector<32x128xbf16>, vector<8x128xf32> -> vector<8x128xf32>
    %101 = vector.broadcast %15 : vector<1x128xf32> to vector<8x128xf32>
    %102 = arith.addf %101, %100 : vector<8x128xf32>
    %cst_46 = arith.constant dense<0.000000e+00> : vector<8x128xf32>
    %103 = tpu.matmul %73, %14, %cst_46 {dimension_numbers = #tpu.dot_dimension_numbers<[1], [0], [0], [1], [0, 0, 1, 1], [], []>} : vector<8x32xbf16>, vector<32x128xbf16>, vector<8x128xf32> -> vector<8x128xf32>
    %104 = arith.addf %102, %103 : vector<8x128xf32>
    %105 = math.tanh %104 : vector<8x128xf32>
    %106 = vector.extract_strided_slice %105 {offsets = [0, 0], sizes = [8, 32], strides = [1, 1]} : vector<8x128xf32> to vector<8x32xf32>
    %cst_47 = arith.constant 5.000000e-01 : f32
    %107 = vector.broadcast %cst_47 : f32 to vector<8x32xf32>
    %108 = arith.mulf %106, %107 : vector<8x32xf32>
    %cst_48 = arith.constant 5.000000e-01 : f32
    %109 = vector.broadcast %cst_48 : f32 to vector<8x32xf32>
    %110 = arith.addf %108, %109 : vector<8x32xf32>
    %111 = vector.extract_strided_slice %105 {offsets = [0, 32], sizes = [8, 32], strides = [1, 1]} : vector<8x128xf32> to vector<8x32xf32>
    %cst_49 = arith.constant 5.000000e-01 : f32
    %112 = vector.broadcast %cst_49 : f32 to vector<8x32xf32>
    %113 = arith.mulf %111, %112 : vector<8x32xf32>
    %cst_50 = arith.constant 5.000000e-01 : f32
    %114 = vector.broadcast %cst_50 : f32 to vector<8x32xf32>
    %115 = arith.addf %113, %114 : vector<8x32xf32>
    %116 = vector.extract_strided_slice %105 {offsets = [0, 64], sizes = [8, 32], strides = [1, 1]} : vector<8x128xf32> to vector<8x32xf32>
    %117 = vector.extract_strided_slice %105 {offsets = [0, 96], sizes = [8, 32], strides = [1, 1]} : vector<8x128xf32> to vector<8x32xf32>
    %cst_51 = arith.constant 5.000000e-01 : f32
    %118 = vector.broadcast %cst_51 : f32 to vector<8x32xf32>
    %119 = arith.mulf %117, %118 : vector<8x32xf32>
    %cst_52 = arith.constant 5.000000e-01 : f32
    %120 = vector.broadcast %cst_52 : f32 to vector<8x32xf32>
    %121 = arith.addf %119, %120 : vector<8x32xf32>
    %122 = arith.mulf %115, %70 : vector<8x32xf32>
    %123 = arith.mulf %110, %116 : vector<8x32xf32>
    %124 = arith.addf %122, %123 : vector<8x32xf32>
    %125 = math.tanh %124 : vector<8x32xf32>
    %126 = arith.mulf %121, %125 : vector<8x32xf32>
    %127 = arith.truncf %126 : vector<8x32xf32> to vector<8x32xbf16>
    %128 = vector.extract_strided_slice %5 {offsets = [16, 0], sizes = [8, 128], strides = [1, 1]} : vector<64x128xf32> to vector<8x128xf32>
    %cst_53 = arith.constant dense<0.000000e+00> : vector<8x128xf32>
    %129 = tpu.matmul %99, %12, %cst_53 {dimension_numbers = #tpu.dot_dimension_numbers<[1], [0], [0], [1], [0, 0, 1, 1], [], []>} : vector<8x32xbf16>, vector<32x128xbf16>, vector<8x128xf32> -> vector<8x128xf32>
    %130 = arith.addf %128, %129 : vector<8x128xf32>
    %131 = math.tanh %130 : vector<8x128xf32>
    %132 = vector.extract_strided_slice %131 {offsets = [0, 0], sizes = [8, 32], strides = [1, 1]} : vector<8x128xf32> to vector<8x32xf32>
    %cst_54 = arith.constant 5.000000e-01 : f32
    %133 = vector.broadcast %cst_54 : f32 to vector<8x32xf32>
    %134 = arith.mulf %132, %133 : vector<8x32xf32>
    %cst_55 = arith.constant 5.000000e-01 : f32
    %135 = vector.broadcast %cst_55 : f32 to vector<8x32xf32>
    %136 = arith.addf %134, %135 : vector<8x32xf32>
    %137 = vector.extract_strided_slice %131 {offsets = [0, 32], sizes = [8, 32], strides = [1, 1]} : vector<8x128xf32> to vector<8x32xf32>
    %cst_56 = arith.constant 5.000000e-01 : f32
    %138 = vector.broadcast %cst_56 : f32 to vector<8x32xf32>
    %139 = arith.mulf %137, %138 : vector<8x32xf32>
    %cst_57 = arith.constant 5.000000e-01 : f32
    %140 = vector.broadcast %cst_57 : f32 to vector<8x32xf32>
    %141 = arith.addf %139, %140 : vector<8x32xf32>
    %142 = vector.extract_strided_slice %131 {offsets = [0, 64], sizes = [8, 32], strides = [1, 1]} : vector<8x128xf32> to vector<8x32xf32>
    %143 = vector.extract_strided_slice %131 {offsets = [0, 96], sizes = [8, 32], strides = [1, 1]} : vector<8x128xf32> to vector<8x32xf32>
    %cst_58 = arith.constant 5.000000e-01 : f32
    %144 = vector.broadcast %cst_58 : f32 to vector<8x32xf32>
    %145 = arith.mulf %143, %144 : vector<8x32xf32>
    %cst_59 = arith.constant 5.000000e-01 : f32
    %146 = vector.broadcast %cst_59 : f32 to vector<8x32xf32>
    %147 = arith.addf %145, %146 : vector<8x32xf32>
    %148 = arith.mulf %141, %96 : vector<8x32xf32>
    %149 = arith.mulf %136, %142 : vector<8x32xf32>
    %150 = arith.addf %148, %149 : vector<8x32xf32>
    %151 = math.tanh %150 : vector<8x32xf32>
    %152 = arith.mulf %147, %151 : vector<8x32xf32>
    %153 = arith.truncf %152 : vector<8x32xf32> to vector<8x32xbf16>
    %cst_60 = arith.constant dense<0.000000e+00> : vector<8x128xf32>
    %154 = tpu.matmul %153, %13, %cst_60 {dimension_numbers = #tpu.dot_dimension_numbers<[1], [0], [0], [1], [0, 0, 1, 1], [], []>} : vector<8x32xbf16>, vector<32x128xbf16>, vector<8x128xf32> -> vector<8x128xf32>
    %155 = vector.broadcast %15 : vector<1x128xf32> to vector<8x128xf32>
    %156 = arith.addf %155, %154 : vector<8x128xf32>
    %cst_61 = arith.constant dense<0.000000e+00> : vector<8x128xf32>
    %157 = tpu.matmul %127, %14, %cst_61 {dimension_numbers = #tpu.dot_dimension_numbers<[1], [0], [0], [1], [0, 0, 1, 1], [], []>} : vector<8x32xbf16>, vector<32x128xbf16>, vector<8x128xf32> -> vector<8x128xf32>
    %158 = arith.addf %156, %157 : vector<8x128xf32>
    %159 = math.tanh %158 : vector<8x128xf32>
    %160 = vector.extract_strided_slice %159 {offsets = [0, 0], sizes = [8, 32], strides = [1, 1]} : vector<8x128xf32> to vector<8x32xf32>
    %cst_62 = arith.constant 5.000000e-01 : f32
    %161 = vector.broadcast %cst_62 : f32 to vector<8x32xf32>
    %162 = arith.mulf %160, %161 : vector<8x32xf32>
    %cst_63 = arith.constant 5.000000e-01 : f32
    %163 = vector.broadcast %cst_63 : f32 to vector<8x32xf32>
    %164 = arith.addf %162, %163 : vector<8x32xf32>
    %165 = vector.extract_strided_slice %159 {offsets = [0, 32], sizes = [8, 32], strides = [1, 1]} : vector<8x128xf32> to vector<8x32xf32>
    %cst_64 = arith.constant 5.000000e-01 : f32
    %166 = vector.broadcast %cst_64 : f32 to vector<8x32xf32>
    %167 = arith.mulf %165, %166 : vector<8x32xf32>
    %cst_65 = arith.constant 5.000000e-01 : f32
    %168 = vector.broadcast %cst_65 : f32 to vector<8x32xf32>
    %169 = arith.addf %167, %168 : vector<8x32xf32>
    %170 = vector.extract_strided_slice %159 {offsets = [0, 64], sizes = [8, 32], strides = [1, 1]} : vector<8x128xf32> to vector<8x32xf32>
    %171 = vector.extract_strided_slice %159 {offsets = [0, 96], sizes = [8, 32], strides = [1, 1]} : vector<8x128xf32> to vector<8x32xf32>
    %cst_66 = arith.constant 5.000000e-01 : f32
    %172 = vector.broadcast %cst_66 : f32 to vector<8x32xf32>
    %173 = arith.mulf %171, %172 : vector<8x32xf32>
    %cst_67 = arith.constant 5.000000e-01 : f32
    %174 = vector.broadcast %cst_67 : f32 to vector<8x32xf32>
    %175 = arith.addf %173, %174 : vector<8x32xf32>
    %176 = arith.mulf %169, %124 : vector<8x32xf32>
    %177 = arith.mulf %164, %170 : vector<8x32xf32>
    %178 = arith.addf %176, %177 : vector<8x32xf32>
    %179 = math.tanh %178 : vector<8x32xf32>
    %180 = arith.mulf %175, %179 : vector<8x32xf32>
    %181 = arith.truncf %180 : vector<8x32xf32> to vector<8x32xbf16>
    %182 = vector.extract_strided_slice %5 {offsets = [24, 0], sizes = [8, 128], strides = [1, 1]} : vector<64x128xf32> to vector<8x128xf32>
    %cst_68 = arith.constant dense<0.000000e+00> : vector<8x128xf32>
    %183 = tpu.matmul %153, %12, %cst_68 {dimension_numbers = #tpu.dot_dimension_numbers<[1], [0], [0], [1], [0, 0, 1, 1], [], []>} : vector<8x32xbf16>, vector<32x128xbf16>, vector<8x128xf32> -> vector<8x128xf32>
    %184 = arith.addf %182, %183 : vector<8x128xf32>
    %185 = math.tanh %184 : vector<8x128xf32>
    %186 = vector.extract_strided_slice %185 {offsets = [0, 0], sizes = [8, 32], strides = [1, 1]} : vector<8x128xf32> to vector<8x32xf32>
    %cst_69 = arith.constant 5.000000e-01 : f32
    %187 = vector.broadcast %cst_69 : f32 to vector<8x32xf32>
    %188 = arith.mulf %186, %187 : vector<8x32xf32>
    %cst_70 = arith.constant 5.000000e-01 : f32
    %189 = vector.broadcast %cst_70 : f32 to vector<8x32xf32>
    %190 = arith.addf %188, %189 : vector<8x32xf32>
    %191 = vector.extract_strided_slice %185 {offsets = [0, 32], sizes = [8, 32], strides = [1, 1]} : vector<8x128xf32> to vector<8x32xf32>
    %cst_71 = arith.constant 5.000000e-01 : f32
    %192 = vector.broadcast %cst_71 : f32 to vector<8x32xf32>
    %193 = arith.mulf %191, %192 : vector<8x32xf32>
    %cst_72 = arith.constant 5.000000e-01 : f32
    %194 = vector.broadcast %cst_72 : f32 to vector<8x32xf32>
    %195 = arith.addf %193, %194 : vector<8x32xf32>
    %196 = vector.extract_strided_slice %185 {offsets = [0, 64], sizes = [8, 32], strides = [1, 1]} : vector<8x128xf32> to vector<8x32xf32>
    %197 = vector.extract_strided_slice %185 {offsets = [0, 96], sizes = [8, 32], strides = [1, 1]} : vector<8x128xf32> to vector<8x32xf32>
    %cst_73 = arith.constant 5.000000e-01 : f32
    %198 = vector.broadcast %cst_73 : f32 to vector<8x32xf32>
    %199 = arith.mulf %197, %198 : vector<8x32xf32>
    %cst_74 = arith.constant 5.000000e-01 : f32
    %200 = vector.broadcast %cst_74 : f32 to vector<8x32xf32>
    %201 = arith.addf %199, %200 : vector<8x32xf32>
    %202 = arith.mulf %195, %150 : vector<8x32xf32>
    %203 = arith.mulf %190, %196 : vector<8x32xf32>
    %204 = arith.addf %202, %203 : vector<8x32xf32>
    %205 = math.tanh %204 : vector<8x32xf32>
    %206 = arith.mulf %201, %205 : vector<8x32xf32>
    %207 = arith.truncf %206 : vector<8x32xf32> to vector<8x32xbf16>
    %cst_75 = arith.constant dense<0.000000e+00> : vector<8x128xf32>
    %208 = tpu.matmul %207, %13, %cst_75 {dimension_numbers = #tpu.dot_dimension_numbers<[1], [0], [0], [1], [0, 0, 1, 1], [], []>} : vector<8x32xbf16>, vector<32x128xbf16>, vector<8x128xf32> -> vector<8x128xf32>
    %209 = vector.broadcast %15 : vector<1x128xf32> to vector<8x128xf32>
    %210 = arith.addf %209, %208 : vector<8x128xf32>
    %cst_76 = arith.constant dense<0.000000e+00> : vector<8x128xf32>
    %211 = tpu.matmul %181, %14, %cst_76 {dimension_numbers = #tpu.dot_dimension_numbers<[1], [0], [0], [1], [0, 0, 1, 1], [], []>} : vector<8x32xbf16>, vector<32x128xbf16>, vector<8x128xf32> -> vector<8x128xf32>
    %212 = arith.addf %210, %211 : vector<8x128xf32>
    %213 = math.tanh %212 : vector<8x128xf32>
    %214 = vector.extract_strided_slice %213 {offsets = [0, 0], sizes = [8, 32], strides = [1, 1]} : vector<8x128xf32> to vector<8x32xf32>
    %cst_77 = arith.constant 5.000000e-01 : f32
    %215 = vector.broadcast %cst_77 : f32 to vector<8x32xf32>
    %216 = arith.mulf %214, %215 : vector<8x32xf32>
    %cst_78 = arith.constant 5.000000e-01 : f32
    %217 = vector.broadcast %cst_78 : f32 to vector<8x32xf32>
    %218 = arith.addf %216, %217 : vector<8x32xf32>
    %219 = vector.extract_strided_slice %213 {offsets = [0, 32], sizes = [8, 32], strides = [1, 1]} : vector<8x128xf32> to vector<8x32xf32>
    %cst_79 = arith.constant 5.000000e-01 : f32
    %220 = vector.broadcast %cst_79 : f32 to vector<8x32xf32>
    %221 = arith.mulf %219, %220 : vector<8x32xf32>
    %cst_80 = arith.constant 5.000000e-01 : f32
    %222 = vector.broadcast %cst_80 : f32 to vector<8x32xf32>
    %223 = arith.addf %221, %222 : vector<8x32xf32>
    %224 = vector.extract_strided_slice %213 {offsets = [0, 64], sizes = [8, 32], strides = [1, 1]} : vector<8x128xf32> to vector<8x32xf32>
    %225 = vector.extract_strided_slice %213 {offsets = [0, 96], sizes = [8, 32], strides = [1, 1]} : vector<8x128xf32> to vector<8x32xf32>
    %cst_81 = arith.constant 5.000000e-01 : f32
    %226 = vector.broadcast %cst_81 : f32 to vector<8x32xf32>
    %227 = arith.mulf %225, %226 : vector<8x32xf32>
    %cst_82 = arith.constant 5.000000e-01 : f32
    %228 = vector.broadcast %cst_82 : f32 to vector<8x32xf32>
    %229 = arith.addf %227, %228 : vector<8x32xf32>
    %230 = arith.mulf %223, %178 : vector<8x32xf32>
    %231 = arith.mulf %218, %224 : vector<8x32xf32>
    %232 = arith.addf %230, %231 : vector<8x32xf32>
    %233 = math.tanh %232 : vector<8x32xf32>
    %234 = arith.mulf %229, %233 : vector<8x32xf32>
    %235 = arith.truncf %234 : vector<8x32xf32> to vector<8x32xbf16>
    %236 = vector.extract_strided_slice %5 {offsets = [32, 0], sizes = [8, 128], strides = [1, 1]} : vector<64x128xf32> to vector<8x128xf32>
    %cst_83 = arith.constant dense<0.000000e+00> : vector<8x128xf32>
    %237 = tpu.matmul %207, %12, %cst_83 {dimension_numbers = #tpu.dot_dimension_numbers<[1], [0], [0], [1], [0, 0, 1, 1], [], []>} : vector<8x32xbf16>, vector<32x128xbf16>, vector<8x128xf32> -> vector<8x128xf32>
    %238 = arith.addf %236, %237 : vector<8x128xf32>
    %239 = math.tanh %238 : vector<8x128xf32>
    %240 = vector.extract_strided_slice %239 {offsets = [0, 0], sizes = [8, 32], strides = [1, 1]} : vector<8x128xf32> to vector<8x32xf32>
    %cst_84 = arith.constant 5.000000e-01 : f32
    %241 = vector.broadcast %cst_84 : f32 to vector<8x32xf32>
    %242 = arith.mulf %240, %241 : vector<8x32xf32>
    %cst_85 = arith.constant 5.000000e-01 : f32
    %243 = vector.broadcast %cst_85 : f32 to vector<8x32xf32>
    %244 = arith.addf %242, %243 : vector<8x32xf32>
    %245 = vector.extract_strided_slice %239 {offsets = [0, 32], sizes = [8, 32], strides = [1, 1]} : vector<8x128xf32> to vector<8x32xf32>
    %cst_86 = arith.constant 5.000000e-01 : f32
    %246 = vector.broadcast %cst_86 : f32 to vector<8x32xf32>
    %247 = arith.mulf %245, %246 : vector<8x32xf32>
    %cst_87 = arith.constant 5.000000e-01 : f32
    %248 = vector.broadcast %cst_87 : f32 to vector<8x32xf32>
    %249 = arith.addf %247, %248 : vector<8x32xf32>
    %250 = vector.extract_strided_slice %239 {offsets = [0, 64], sizes = [8, 32], strides = [1, 1]} : vector<8x128xf32> to vector<8x32xf32>
    %251 = vector.extract_strided_slice %239 {offsets = [0, 96], sizes = [8, 32], strides = [1, 1]} : vector<8x128xf32> to vector<8x32xf32>
    %cst_88 = arith.constant 5.000000e-01 : f32
    %252 = vector.broadcast %cst_88 : f32 to vector<8x32xf32>
    %253 = arith.mulf %251, %252 : vector<8x32xf32>
    %cst_89 = arith.constant 5.000000e-01 : f32
    %254 = vector.broadcast %cst_89 : f32 to vector<8x32xf32>
    %255 = arith.addf %253, %254 : vector<8x32xf32>
    %256 = arith.mulf %249, %204 : vector<8x32xf32>
    %257 = arith.mulf %244, %250 : vector<8x32xf32>
    %258 = arith.addf %256, %257 : vector<8x32xf32>
    %259 = math.tanh %258 : vector<8x32xf32>
    %260 = arith.mulf %255, %259 : vector<8x32xf32>
    %261 = arith.truncf %260 : vector<8x32xf32> to vector<8x32xbf16>
    %cst_90 = arith.constant dense<0.000000e+00> : vector<8x128xf32>
    %262 = tpu.matmul %261, %13, %cst_90 {dimension_numbers = #tpu.dot_dimension_numbers<[1], [0], [0], [1], [0, 0, 1, 1], [], []>} : vector<8x32xbf16>, vector<32x128xbf16>, vector<8x128xf32> -> vector<8x128xf32>
    %263 = vector.broadcast %15 : vector<1x128xf32> to vector<8x128xf32>
    %264 = arith.addf %263, %262 : vector<8x128xf32>
    %cst_91 = arith.constant dense<0.000000e+00> : vector<8x128xf32>
    %265 = tpu.matmul %235, %14, %cst_91 {dimension_numbers = #tpu.dot_dimension_numbers<[1], [0], [0], [1], [0, 0, 1, 1], [], []>} : vector<8x32xbf16>, vector<32x128xbf16>, vector<8x128xf32> -> vector<8x128xf32>
    %266 = arith.addf %264, %265 : vector<8x128xf32>
    %267 = math.tanh %266 : vector<8x128xf32>
    %268 = vector.extract_strided_slice %267 {offsets = [0, 0], sizes = [8, 32], strides = [1, 1]} : vector<8x128xf32> to vector<8x32xf32>
    %cst_92 = arith.constant 5.000000e-01 : f32
    %269 = vector.broadcast %cst_92 : f32 to vector<8x32xf32>
    %270 = arith.mulf %268, %269 : vector<8x32xf32>
    %cst_93 = arith.constant 5.000000e-01 : f32
    %271 = vector.broadcast %cst_93 : f32 to vector<8x32xf32>
    %272 = arith.addf %270, %271 : vector<8x32xf32>
    %273 = vector.extract_strided_slice %267 {offsets = [0, 32], sizes = [8, 32], strides = [1, 1]} : vector<8x128xf32> to vector<8x32xf32>
    %cst_94 = arith.constant 5.000000e-01 : f32
    %274 = vector.broadcast %cst_94 : f32 to vector<8x32xf32>
    %275 = arith.mulf %273, %274 : vector<8x32xf32>
    %cst_95 = arith.constant 5.000000e-01 : f32
    %276 = vector.broadcast %cst_95 : f32 to vector<8x32xf32>
    %277 = arith.addf %275, %276 : vector<8x32xf32>
    %278 = vector.extract_strided_slice %267 {offsets = [0, 64], sizes = [8, 32], strides = [1, 1]} : vector<8x128xf32> to vector<8x32xf32>
    %279 = vector.extract_strided_slice %267 {offsets = [0, 96], sizes = [8, 32], strides = [1, 1]} : vector<8x128xf32> to vector<8x32xf32>
    %cst_96 = arith.constant 5.000000e-01 : f32
    %280 = vector.broadcast %cst_96 : f32 to vector<8x32xf32>
    %281 = arith.mulf %279, %280 : vector<8x32xf32>
    %cst_97 = arith.constant 5.000000e-01 : f32
    %282 = vector.broadcast %cst_97 : f32 to vector<8x32xf32>
    %283 = arith.addf %281, %282 : vector<8x32xf32>
    %284 = arith.mulf %277, %232 : vector<8x32xf32>
    %285 = arith.mulf %272, %278 : vector<8x32xf32>
    %286 = arith.addf %284, %285 : vector<8x32xf32>
    %287 = math.tanh %286 : vector<8x32xf32>
    %288 = arith.mulf %283, %287 : vector<8x32xf32>
    %289 = arith.truncf %288 : vector<8x32xf32> to vector<8x32xbf16>
    %290 = vector.extract_strided_slice %5 {offsets = [40, 0], sizes = [8, 128], strides = [1, 1]} : vector<64x128xf32> to vector<8x128xf32>
    %cst_98 = arith.constant dense<0.000000e+00> : vector<8x128xf32>
    %291 = tpu.matmul %261, %12, %cst_98 {dimension_numbers = #tpu.dot_dimension_numbers<[1], [0], [0], [1], [0, 0, 1, 1], [], []>} : vector<8x32xbf16>, vector<32x128xbf16>, vector<8x128xf32> -> vector<8x128xf32>
    %292 = arith.addf %290, %291 : vector<8x128xf32>
    %293 = math.tanh %292 : vector<8x128xf32>
    %294 = vector.extract_strided_slice %293 {offsets = [0, 0], sizes = [8, 32], strides = [1, 1]} : vector<8x128xf32> to vector<8x32xf32>
    %cst_99 = arith.constant 5.000000e-01 : f32
    %295 = vector.broadcast %cst_99 : f32 to vector<8x32xf32>
    %296 = arith.mulf %294, %295 : vector<8x32xf32>
    %cst_100 = arith.constant 5.000000e-01 : f32
    %297 = vector.broadcast %cst_100 : f32 to vector<8x32xf32>
    %298 = arith.addf %296, %297 : vector<8x32xf32>
    %299 = vector.extract_strided_slice %293 {offsets = [0, 32], sizes = [8, 32], strides = [1, 1]} : vector<8x128xf32> to vector<8x32xf32>
    %cst_101 = arith.constant 5.000000e-01 : f32
    %300 = vector.broadcast %cst_101 : f32 to vector<8x32xf32>
    %301 = arith.mulf %299, %300 : vector<8x32xf32>
    %cst_102 = arith.constant 5.000000e-01 : f32
    %302 = vector.broadcast %cst_102 : f32 to vector<8x32xf32>
    %303 = arith.addf %301, %302 : vector<8x32xf32>
    %304 = vector.extract_strided_slice %293 {offsets = [0, 64], sizes = [8, 32], strides = [1, 1]} : vector<8x128xf32> to vector<8x32xf32>
    %305 = vector.extract_strided_slice %293 {offsets = [0, 96], sizes = [8, 32], strides = [1, 1]} : vector<8x128xf32> to vector<8x32xf32>
    %cst_103 = arith.constant 5.000000e-01 : f32
    %306 = vector.broadcast %cst_103 : f32 to vector<8x32xf32>
    %307 = arith.mulf %305, %306 : vector<8x32xf32>
    %cst_104 = arith.constant 5.000000e-01 : f32
    %308 = vector.broadcast %cst_104 : f32 to vector<8x32xf32>
    %309 = arith.addf %307, %308 : vector<8x32xf32>
    %310 = arith.mulf %303, %258 : vector<8x32xf32>
    %311 = arith.mulf %298, %304 : vector<8x32xf32>
    %312 = arith.addf %310, %311 : vector<8x32xf32>
    %313 = math.tanh %312 : vector<8x32xf32>
    %314 = arith.mulf %309, %313 : vector<8x32xf32>
    %315 = arith.truncf %314 : vector<8x32xf32> to vector<8x32xbf16>
    %cst_105 = arith.constant dense<0.000000e+00> : vector<8x128xf32>
    %316 = tpu.matmul %315, %13, %cst_105 {dimension_numbers = #tpu.dot_dimension_numbers<[1], [0], [0], [1], [0, 0, 1, 1], [], []>} : vector<8x32xbf16>, vector<32x128xbf16>, vector<8x128xf32> -> vector<8x128xf32>
    %317 = vector.broadcast %15 : vector<1x128xf32> to vector<8x128xf32>
    %318 = arith.addf %317, %316 : vector<8x128xf32>
    %cst_106 = arith.constant dense<0.000000e+00> : vector<8x128xf32>
    %319 = tpu.matmul %289, %14, %cst_106 {dimension_numbers = #tpu.dot_dimension_numbers<[1], [0], [0], [1], [0, 0, 1, 1], [], []>} : vector<8x32xbf16>, vector<32x128xbf16>, vector<8x128xf32> -> vector<8x128xf32>
    %320 = arith.addf %318, %319 : vector<8x128xf32>
    %321 = math.tanh %320 : vector<8x128xf32>
    %322 = vector.extract_strided_slice %321 {offsets = [0, 0], sizes = [8, 32], strides = [1, 1]} : vector<8x128xf32> to vector<8x32xf32>
    %cst_107 = arith.constant 5.000000e-01 : f32
    %323 = vector.broadcast %cst_107 : f32 to vector<8x32xf32>
    %324 = arith.mulf %322, %323 : vector<8x32xf32>
    %cst_108 = arith.constant 5.000000e-01 : f32
    %325 = vector.broadcast %cst_108 : f32 to vector<8x32xf32>
    %326 = arith.addf %324, %325 : vector<8x32xf32>
    %327 = vector.extract_strided_slice %321 {offsets = [0, 32], sizes = [8, 32], strides = [1, 1]} : vector<8x128xf32> to vector<8x32xf32>
    %cst_109 = arith.constant 5.000000e-01 : f32
    %328 = vector.broadcast %cst_109 : f32 to vector<8x32xf32>
    %329 = arith.mulf %327, %328 : vector<8x32xf32>
    %cst_110 = arith.constant 5.000000e-01 : f32
    %330 = vector.broadcast %cst_110 : f32 to vector<8x32xf32>
    %331 = arith.addf %329, %330 : vector<8x32xf32>
    %332 = vector.extract_strided_slice %321 {offsets = [0, 64], sizes = [8, 32], strides = [1, 1]} : vector<8x128xf32> to vector<8x32xf32>
    %333 = vector.extract_strided_slice %321 {offsets = [0, 96], sizes = [8, 32], strides = [1, 1]} : vector<8x128xf32> to vector<8x32xf32>
    %cst_111 = arith.constant 5.000000e-01 : f32
    %334 = vector.broadcast %cst_111 : f32 to vector<8x32xf32>
    %335 = arith.mulf %333, %334 : vector<8x32xf32>
    %cst_112 = arith.constant 5.000000e-01 : f32
    %336 = vector.broadcast %cst_112 : f32 to vector<8x32xf32>
    %337 = arith.addf %335, %336 : vector<8x32xf32>
    %338 = arith.mulf %331, %286 : vector<8x32xf32>
    %339 = arith.mulf %326, %332 : vector<8x32xf32>
    %340 = arith.addf %338, %339 : vector<8x32xf32>
    %341 = math.tanh %340 : vector<8x32xf32>
    %342 = arith.mulf %337, %341 : vector<8x32xf32>
    %343 = arith.truncf %342 : vector<8x32xf32> to vector<8x32xbf16>
    %344 = vector.extract_strided_slice %5 {offsets = [48, 0], sizes = [8, 128], strides = [1, 1]} : vector<64x128xf32> to vector<8x128xf32>
    %cst_113 = arith.constant dense<0.000000e+00> : vector<8x128xf32>
    %345 = tpu.matmul %315, %12, %cst_113 {dimension_numbers = #tpu.dot_dimension_numbers<[1], [0], [0], [1], [0, 0, 1, 1], [], []>} : vector<8x32xbf16>, vector<32x128xbf16>, vector<8x128xf32> -> vector<8x128xf32>
    %346 = arith.addf %344, %345 : vector<8x128xf32>
    %347 = math.tanh %346 : vector<8x128xf32>
    %348 = vector.extract_strided_slice %347 {offsets = [0, 0], sizes = [8, 32], strides = [1, 1]} : vector<8x128xf32> to vector<8x32xf32>
    %cst_114 = arith.constant 5.000000e-01 : f32
    %349 = vector.broadcast %cst_114 : f32 to vector<8x32xf32>
    %350 = arith.mulf %348, %349 : vector<8x32xf32>
    %cst_115 = arith.constant 5.000000e-01 : f32
    %351 = vector.broadcast %cst_115 : f32 to vector<8x32xf32>
    %352 = arith.addf %350, %351 : vector<8x32xf32>
    %353 = vector.extract_strided_slice %347 {offsets = [0, 32], sizes = [8, 32], strides = [1, 1]} : vector<8x128xf32> to vector<8x32xf32>
    %cst_116 = arith.constant 5.000000e-01 : f32
    %354 = vector.broadcast %cst_116 : f32 to vector<8x32xf32>
    %355 = arith.mulf %353, %354 : vector<8x32xf32>
    %cst_117 = arith.constant 5.000000e-01 : f32
    %356 = vector.broadcast %cst_117 : f32 to vector<8x32xf32>
    %357 = arith.addf %355, %356 : vector<8x32xf32>
    %358 = vector.extract_strided_slice %347 {offsets = [0, 64], sizes = [8, 32], strides = [1, 1]} : vector<8x128xf32> to vector<8x32xf32>
    %359 = vector.extract_strided_slice %347 {offsets = [0, 96], sizes = [8, 32], strides = [1, 1]} : vector<8x128xf32> to vector<8x32xf32>
    %cst_118 = arith.constant 5.000000e-01 : f32
    %360 = vector.broadcast %cst_118 : f32 to vector<8x32xf32>
    %361 = arith.mulf %359, %360 : vector<8x32xf32>
    %cst_119 = arith.constant 5.000000e-01 : f32
    %362 = vector.broadcast %cst_119 : f32 to vector<8x32xf32>
    %363 = arith.addf %361, %362 : vector<8x32xf32>
    %364 = arith.mulf %357, %312 : vector<8x32xf32>
    %365 = arith.mulf %352, %358 : vector<8x32xf32>
    %366 = arith.addf %364, %365 : vector<8x32xf32>
    %367 = math.tanh %366 : vector<8x32xf32>
    %368 = arith.mulf %363, %367 : vector<8x32xf32>
    %369 = arith.truncf %368 : vector<8x32xf32> to vector<8x32xbf16>
    %cst_120 = arith.constant dense<0.000000e+00> : vector<8x128xf32>
    %370 = tpu.matmul %369, %13, %cst_120 {dimension_numbers = #tpu.dot_dimension_numbers<[1], [0], [0], [1], [0, 0, 1, 1], [], []>} : vector<8x32xbf16>, vector<32x128xbf16>, vector<8x128xf32> -> vector<8x128xf32>
    %371 = vector.broadcast %15 : vector<1x128xf32> to vector<8x128xf32>
    %372 = arith.addf %371, %370 : vector<8x128xf32>
    %cst_121 = arith.constant dense<0.000000e+00> : vector<8x128xf32>
    %373 = tpu.matmul %343, %14, %cst_121 {dimension_numbers = #tpu.dot_dimension_numbers<[1], [0], [0], [1], [0, 0, 1, 1], [], []>} : vector<8x32xbf16>, vector<32x128xbf16>, vector<8x128xf32> -> vector<8x128xf32>
    %374 = arith.addf %372, %373 : vector<8x128xf32>
    %375 = math.tanh %374 : vector<8x128xf32>
    %376 = vector.extract_strided_slice %375 {offsets = [0, 0], sizes = [8, 32], strides = [1, 1]} : vector<8x128xf32> to vector<8x32xf32>
    %cst_122 = arith.constant 5.000000e-01 : f32
    %377 = vector.broadcast %cst_122 : f32 to vector<8x32xf32>
    %378 = arith.mulf %376, %377 : vector<8x32xf32>
    %cst_123 = arith.constant 5.000000e-01 : f32
    %379 = vector.broadcast %cst_123 : f32 to vector<8x32xf32>
    %380 = arith.addf %378, %379 : vector<8x32xf32>
    %381 = vector.extract_strided_slice %375 {offsets = [0, 32], sizes = [8, 32], strides = [1, 1]} : vector<8x128xf32> to vector<8x32xf32>
    %cst_124 = arith.constant 5.000000e-01 : f32
    %382 = vector.broadcast %cst_124 : f32 to vector<8x32xf32>
    %383 = arith.mulf %381, %382 : vector<8x32xf32>
    %cst_125 = arith.constant 5.000000e-01 : f32
    %384 = vector.broadcast %cst_125 : f32 to vector<8x32xf32>
    %385 = arith.addf %383, %384 : vector<8x32xf32>
    %386 = vector.extract_strided_slice %375 {offsets = [0, 64], sizes = [8, 32], strides = [1, 1]} : vector<8x128xf32> to vector<8x32xf32>
    %387 = vector.extract_strided_slice %375 {offsets = [0, 96], sizes = [8, 32], strides = [1, 1]} : vector<8x128xf32> to vector<8x32xf32>
    %cst_126 = arith.constant 5.000000e-01 : f32
    %388 = vector.broadcast %cst_126 : f32 to vector<8x32xf32>
    %389 = arith.mulf %387, %388 : vector<8x32xf32>
    %cst_127 = arith.constant 5.000000e-01 : f32
    %390 = vector.broadcast %cst_127 : f32 to vector<8x32xf32>
    %391 = arith.addf %389, %390 : vector<8x32xf32>
    %392 = arith.mulf %385, %340 : vector<8x32xf32>
    %393 = arith.mulf %380, %386 : vector<8x32xf32>
    %394 = arith.addf %392, %393 : vector<8x32xf32>
    %395 = math.tanh %394 : vector<8x32xf32>
    %396 = arith.mulf %391, %395 : vector<8x32xf32>
    %397 = arith.truncf %396 : vector<8x32xf32> to vector<8x32xbf16>
    %398 = vector.extract_strided_slice %5 {offsets = [56, 0], sizes = [8, 128], strides = [1, 1]} : vector<64x128xf32> to vector<8x128xf32>
    %cst_128 = arith.constant dense<0.000000e+00> : vector<8x128xf32>
    %399 = tpu.matmul %369, %12, %cst_128 {dimension_numbers = #tpu.dot_dimension_numbers<[1], [0], [0], [1], [0, 0, 1, 1], [], []>} : vector<8x32xbf16>, vector<32x128xbf16>, vector<8x128xf32> -> vector<8x128xf32>
    %400 = arith.addf %398, %399 : vector<8x128xf32>
    %401 = math.tanh %400 : vector<8x128xf32>
    %402 = vector.extract_strided_slice %401 {offsets = [0, 0], sizes = [8, 32], strides = [1, 1]} : vector<8x128xf32> to vector<8x32xf32>
    %cst_129 = arith.constant 5.000000e-01 : f32
    %403 = vector.broadcast %cst_129 : f32 to vector<8x32xf32>
    %404 = arith.mulf %402, %403 : vector<8x32xf32>
    %cst_130 = arith.constant 5.000000e-01 : f32
    %405 = vector.broadcast %cst_130 : f32 to vector<8x32xf32>
    %406 = arith.addf %404, %405 : vector<8x32xf32>
    %407 = vector.extract_strided_slice %401 {offsets = [0, 32], sizes = [8, 32], strides = [1, 1]} : vector<8x128xf32> to vector<8x32xf32>
    %cst_131 = arith.constant 5.000000e-01 : f32
    %408 = vector.broadcast %cst_131 : f32 to vector<8x32xf32>
    %409 = arith.mulf %407, %408 : vector<8x32xf32>
    %cst_132 = arith.constant 5.000000e-01 : f32
    %410 = vector.broadcast %cst_132 : f32 to vector<8x32xf32>
    %411 = arith.addf %409, %410 : vector<8x32xf32>
    %412 = vector.extract_strided_slice %401 {offsets = [0, 64], sizes = [8, 32], strides = [1, 1]} : vector<8x128xf32> to vector<8x32xf32>
    %413 = vector.extract_strided_slice %401 {offsets = [0, 96], sizes = [8, 32], strides = [1, 1]} : vector<8x128xf32> to vector<8x32xf32>
    %cst_133 = arith.constant 5.000000e-01 : f32
    %414 = vector.broadcast %cst_133 : f32 to vector<8x32xf32>
    %415 = arith.mulf %413, %414 : vector<8x32xf32>
    %cst_134 = arith.constant 5.000000e-01 : f32
    %416 = vector.broadcast %cst_134 : f32 to vector<8x32xf32>
    %417 = arith.addf %415, %416 : vector<8x32xf32>
    %418 = arith.mulf %411, %366 : vector<8x32xf32>
    %419 = arith.mulf %406, %412 : vector<8x32xf32>
    %420 = arith.addf %418, %419 : vector<8x32xf32>
    %421 = math.tanh %420 : vector<8x32xf32>
    %422 = arith.mulf %417, %421 : vector<8x32xf32>
    %423 = arith.truncf %422 : vector<8x32xf32> to vector<8x32xbf16>
    %cst_135 = arith.constant dense<0.000000e+00> : vector<8x128xf32>
    %424 = tpu.matmul %423, %13, %cst_135 {dimension_numbers = #tpu.dot_dimension_numbers<[1], [0], [0], [1], [0, 0, 1, 1], [], []>} : vector<8x32xbf16>, vector<32x128xbf16>, vector<8x128xf32> -> vector<8x128xf32>
    %425 = vector.broadcast %15 : vector<1x128xf32> to vector<8x128xf32>
    %426 = arith.addf %425, %424 : vector<8x128xf32>
    %cst_136 = arith.constant dense<0.000000e+00> : vector<8x128xf32>
    %427 = tpu.matmul %397, %14, %cst_136 {dimension_numbers = #tpu.dot_dimension_numbers<[1], [0], [0], [1], [0, 0, 1, 1], [], []>} : vector<8x32xbf16>, vector<32x128xbf16>, vector<8x128xf32> -> vector<8x128xf32>
    %428 = arith.addf %426, %427 : vector<8x128xf32>
    %429 = math.tanh %428 : vector<8x128xf32>
    %430 = vector.extract_strided_slice %429 {offsets = [0, 0], sizes = [8, 32], strides = [1, 1]} : vector<8x128xf32> to vector<8x32xf32>
    %cst_137 = arith.constant 5.000000e-01 : f32
    %431 = vector.broadcast %cst_137 : f32 to vector<8x32xf32>
    %432 = arith.mulf %430, %431 : vector<8x32xf32>
    %cst_138 = arith.constant 5.000000e-01 : f32
    %433 = vector.broadcast %cst_138 : f32 to vector<8x32xf32>
    %434 = arith.addf %432, %433 : vector<8x32xf32>
    %435 = vector.extract_strided_slice %429 {offsets = [0, 32], sizes = [8, 32], strides = [1, 1]} : vector<8x128xf32> to vector<8x32xf32>
    %cst_139 = arith.constant 5.000000e-01 : f32
    %436 = vector.broadcast %cst_139 : f32 to vector<8x32xf32>
    %437 = arith.mulf %435, %436 : vector<8x32xf32>
    %cst_140 = arith.constant 5.000000e-01 : f32
    %438 = vector.broadcast %cst_140 : f32 to vector<8x32xf32>
    %439 = arith.addf %437, %438 : vector<8x32xf32>
    %440 = vector.extract_strided_slice %429 {offsets = [0, 64], sizes = [8, 32], strides = [1, 1]} : vector<8x128xf32> to vector<8x32xf32>
    %441 = vector.extract_strided_slice %429 {offsets = [0, 96], sizes = [8, 32], strides = [1, 1]} : vector<8x128xf32> to vector<8x32xf32>
    %cst_141 = arith.constant 5.000000e-01 : f32
    %442 = vector.broadcast %cst_141 : f32 to vector<8x32xf32>
    %443 = arith.mulf %441, %442 : vector<8x32xf32>
    %cst_142 = arith.constant 5.000000e-01 : f32
    %444 = vector.broadcast %cst_142 : f32 to vector<8x32xf32>
    %445 = arith.addf %443, %444 : vector<8x32xf32>
    %446 = arith.mulf %439, %394 : vector<8x32xf32>
    %447 = arith.mulf %434, %440 : vector<8x32xf32>
    %448 = arith.addf %446, %447 : vector<8x32xf32>
    %449 = math.tanh %448 : vector<8x32xf32>
    %450 = arith.mulf %445, %449 : vector<8x32xf32>
    %451 = arith.truncf %450 : vector<8x32xf32> to vector<8x32xbf16>
    %c0_143 = arith.constant 0 : index
    %c0_144 = arith.constant 0 : index
    %452 = vector.load %arg7[%c0_143, %c0_144] : memref<32x1xbf16, #tpu.memory_space<vmem>>, vector<32x1xbf16>
    %cst_145 = arith.constant dense<0.000000e+00> : vector<8x1xf32>
    %453 = tpu.matmul %451, %452, %cst_145 {dimension_numbers = #tpu.dot_dimension_numbers<[1], [0], [0], [1], [0, 0, 1, 1], [], []>} : vector<8x32xbf16>, vector<32x1xbf16>, vector<8x1xf32> -> vector<8x1xf32>
    %454 = arith.addf %453, %11 : vector<8x1xf32>
    %c0_146 = arith.constant 0 : index
    %c0_147 = arith.constant 0 : index
    %455 = vector.load %arg10[%c0_146, %c0_147] : memref<8x1xf32, #tpu.memory_space<vmem>>, vector<8x1xf32>
    tpu.vector_store %arg10[%c0_146, %c0_147], %454 {strides = array<i32>} : memref<8x1xf32, #tpu.memory_space<vmem>>, vector<8x1xf32>,
    return
  }
}

</mosaic_0001>

<llo_original>
// kernel: tpu_custom_call.1
$region0: #{tpu_custom_call.1}
  #allocation0 [shape = 'u32[]', space=smem, size = 0x4, offset = 0x4, fixed_abs, tag = 'smem constant byte address 0x4 - core index']
  #allocation1 [shape = 'u32[144,128]{1,0:T(1,128)}', space=vmem, size = 0x12000, scoped, tag = 'internal scratch']
  #allocation2 [shape = 'f32[1,1]{1,0:T(1,128)S(1)}', space=vmem, size = 0x200, scoped, tag = 'scoped memory for tpu_custom_call.1']
  %s0 = inlined_call_operand.vmem [shape: bf16[64,10], index: 0, kind: input, shape index: {}]
  %s1 = inlined_call_operand.vmem [shape: bf16[10,128], index: 1, kind: input, shape index: {}]
  %s2 = inlined_call_operand.vmem [shape: f32[1,128], index: 2, kind: input, shape index: {}]
  %s3 = inlined_call_operand.vmem [shape: bf16[32,128], index: 3, kind: input, shape index: {}]
  %s4 = inlined_call_operand.vmem [shape: bf16[32,128], index: 4, kind: input, shape index: {}]
  %s5 = inlined_call_operand.vmem [shape: bf16[32,128], index: 5, kind: input, shape index: {}]
  %s6 = inlined_call_operand.vmem [shape: f32[1,128], index: 6, kind: input, shape index: {}]
  %s7 = inlined_call_operand.vmem [shape: bf16[32,1], index: 7, kind: input, shape index: {}]
  %s8 = inlined_call_operand.vmem [shape: bf16[10,1], index: 8, kind: input, shape index: {}]
  %s9 = inlined_call_operand.<no memory space> [shape: f32[1,1], index: 9, kind: input, shape index: {}]
  %s10 = inlined_call_operand.vmem [shape: f32[8,1], index: 10, kind: output, shape index: {}]
  %s11 = sld [smem:[#allocation0]]
  $region50: #{tpu_custom_call.1} parent=0
    _
  %s13 = ssub.s32 1, %s11
  %s14 = scalar_select 0, %s13, %s11
  %v15 = vstv %s9
  %16 = vst [vmem:[#allocation2] sm:$0x1] %v15
  // Predicated region
  $region2: #{tpu_custom_call.1} parent=0 // pred_check
    _
  $region3: #{tpu_custom_call.1} parent=0 // pred_check_branch
    %18 = sbr.rel (0) target = $region5
  $region4: #{tpu_custom_call.1} parent=0 // pred_region
    _
  $region5: #{tpu_custom_call.1} parent=0 // pred_fallthru
    _
  // Predicated region
  $region6: #{tpu_custom_call.1} parent=0 // pred_check
    _
  $region7: #{tpu_custom_call.1} parent=0 // pred_check_branch
    %20 = sbr.rel (0) target = $region9
  $region8: #{tpu_custom_call.1} parent=0 // pred_region
    _
  $region9: #{tpu_custom_call.1} parent=0 // pred_fallthru
    _
  // Predicated region
  $region10: #{tpu_custom_call.1} parent=0 // pred_check
    _
  $region11: #{tpu_custom_call.1} parent=0 // pred_check_branch
    %22 = sbr.rel (0) target = $region13
  $region12: #{tpu_custom_call.1} parent=0 // pred_region
    _
  $region13: #{tpu_custom_call.1} parent=0 // pred_fallthru
    _
  // Predicated region
  $region14: #{tpu_custom_call.1} parent=0 // pred_check
    _
  $region15: #{tpu_custom_call.1} parent=0 // pred_check_branch
    %24 = sbr.rel (0) target = $region17
  $region16: #{tpu_custom_call.1} parent=0 // pred_region
    _
  $region17: #{tpu_custom_call.1} parent=0 // pred_fallthru
    _
  // Predicated region
  $region18: #{tpu_custom_call.1} parent=0 // pred_check
    _
  $region19: #{tpu_custom_call.1} parent=0 // pred_check_branch
    %26 = sbr.rel (0) target = $region21
  $region20: #{tpu_custom_call.1} parent=0 // pred_region
    _
  $region21: #{tpu_custom_call.1} parent=0 // pred_fallthru
    _
  // Predicated region
  $region22: #{tpu_custom_call.1} parent=0 // pred_check
    _
  $region23: #{tpu_custom_call.1} parent=0 // pred_check_branch
    %28 = sbr.rel (0) target = $region25
  $region24: #{tpu_custom_call.1} parent=0 // pred_region
    _
  $region25: #{tpu_custom_call.1} parent=0 // pred_fallthru
    _
  // Predicated region
  $region26: #{tpu_custom_call.1} parent=0 // pred_check
    _
  $region27: #{tpu_custom_call.1} parent=0 // pred_check_branch
    %30 = sbr.rel (0) target = $region29
  $region28: #{tpu_custom_call.1} parent=0 // pred_region
    _
  $region29: #{tpu_custom_call.1} parent=0 // pred_fallthru
    _
  // Predicated region
  $region30: #{tpu_custom_call.1} parent=0 // pred_check
    _
  $region31: #{tpu_custom_call.1} parent=0 // pred_check_branch
    %32 = sbr.rel (0) target = $region33
  $region32: #{tpu_custom_call.1} parent=0 // pred_region
    _
  $region33: #{tpu_custom_call.1} parent=0 // pred_fallthru
    _
  // Predicated region
  $region34: #{tpu_custom_call.1} parent=0 // pred_check
    _
  $region35: #{tpu_custom_call.1} parent=0 // pred_check_branch
    %34 = sbr.rel (0) target = $region37
  $region36: #{tpu_custom_call.1} parent=0 // pred_region
    _
  $region37: #{tpu_custom_call.1} parent=0 // pred_fallthru
    _
  // Predicated region
  $region38: #{tpu_custom_call.1} parent=0 // pred_check
    _
  $region39: #{tpu_custom_call.1} parent=0 // pred_check_branch
    %36 = sbr.rel (0) target = $region41
  $region40: #{tpu_custom_call.1} parent=0 // pred_region
    _
  $region41: #{tpu_custom_call.1} parent=0 // pred_fallthru
    _
  %v38 = vld [vmem:[%s0] sm:$0xf]
  %v39 = vld [vmem:[%s0 + $0x4] sm:$0xf]
  %v40 = vld [vmem:[%s0 + $0x8] sm:$0xf]
  %v41 = vld [vmem:[%s0 + $0xc] sm:$0xf]
  %v42 = vld [vmem:[%s0 + $0x10] sm:$0xf]
  %v43 = vld [vmem:[%s0 + $0x14] sm:$0xf]
  %v44 = vld [vmem:[%s0 + $0x18] sm:$0xf]
  %v45 = vld [vmem:[%s0 + $0x1c] sm:$0xf]
  %v46 = vld [vmem:[%s1] sm:$0xf]
  %v47 = vld [vmem:[%s1 + $0x4] sm:$0x1]
  %v48 = vld [vmem:[%s2] sm:$0x1]
  %v50 = vlaneseq
  %v51 = vshrl.u32 %v50, 7
  %v52 = vsub.s32 0, %v51
  %v53 = vrot.slane %v48, %v52
  %v63 = vunpack.c.l.b16 %v38
  %v64 = vunpack.c.l.b16 %v39
  %v65 = vunpack.c.l.b16 %v40
  %v66 = vunpack.c.l.b16 %v41
  %v67 = vunpack.c.l.b16 %v42
  %v68 = vunpack.c.l.b16 %v43
  %v69 = vunpack.c.l.b16 %v44
  %v70 = vunpack.c.l.b16 %v45
  %v71 = vpack.c.b16 %v64, %v63
  %v72 = vpack.c.b16 %v66, %v65
  %v73 = vpack.c.b16 %v68, %v67
  %v74 = vpack.c.b16 %v70, %v69
  %v77 = vunpack.c.l.b16 %v46
  %v78 = vunpack.c.l.b16 %v47
  %v79 = vpack.c.b16 %v78, %v77
  %vm80 = vcmask 80896
  %v82 = vsel %vm80, %v71, 0
  %v85 = vsel %vm80, %v72, 0
  %v88 = vsel %vm80, %v73, 0
  %v91 = vsel %vm80, %v74, 0
  %vm93 = vcmask 1044480
  %v95 = vsel %vm93, %v79, 0
  %97 = vmatprep.subr.bf16.mxu0 0
  %98 = vmatpush1.bf16.msra.mxu0 %v95
  %99 = vmatprep.subr.bf16.mxu0 0
  %100 = vmatpush1.bf16.msra.mxu0 0
  %101 = vmatprep.subr.bf16.mxu0 0
  %102 = vmatpush1.bf16.msra.mxu0 0
  %103 = vmatprep.subr.bf16.mxu0 0
  %104 = vmatpush1.bf16.msra.mxu0 0
  %105 = vmatprep.subr.bf16.mxu0 0
  %106 = vmatpush1.bf16.msra.mxu0 0
  %107 = vmatprep.subr.bf16.mxu0 0
  %108 = vmatpush1.bf16.msra.mxu0 0
  %109 = vmatprep.subr.bf16.mxu0 0
  %110 = vmatpush1.bf16.msra.mxu0 0
  %111 = vmatprep.subr.bf16.mxu0 0
  %112 = vmatpush1.bf16.msra.mxu0 0
  %113 = vmatprep.subr.bf16.mxu0 0
  %114 = vmatpush1.bf16.msra.mxu0 0
  %115 = vmatprep.subr.bf16.mxu0 0
  %116 = vmatpush1.bf16.msra.mxu0 0
  %117 = vmatprep.subr.bf16.mxu0 0
  %118 = vmatpush1.bf16.msra.mxu0 0
  %119 = vmatprep.subr.bf16.mxu0 0
  %120 = vmatpush1.bf16.msra.mxu0 0
  %121 = vmatprep.subr.bf16.mxu0 0
  %122 = vmatpush1.bf16.msra.mxu0 0
  %123 = vmatprep.subr.bf16.mxu0 0
  %124 = vmatpush1.bf16.msra.mxu0 0
  %125 = vmatprep.subr.bf16.mxu0 0
  %126 = vmatpush1.bf16.msra.mxu0 0
  %127 = vmatprep.subr.bf16.mxu0 0
  %128 = vmatpush1.bf16.msra.mxu0 0
  %129 = vmatprep.mubr.bf16.mxu0 0
  %130 = vmatmul.mubr.bf16.gmra.mrb[0].mxu0 %v82
  %v131 = vpop.f32.mrb[0].mxu0
  %v132 = vadd.f32 %v53, %v131
  %v133 = vpop.f32.mrb[0].mxu0
  %v134 = vpop.f32.mrb[0].mxu0
  %v135 = vadd.f32 %v53, %v134
  %v136 = vpop.f32.mrb[0].mxu0
  %137 = vmatprep.mubr.bf16.mxu0 0
  %138 = vmatmul.mubr.bf16.gmra.mrb[0].mxu0 %v85
  %v139 = vpop.f32.mrb[0].mxu0
  %v140 = vadd.f32 %v53, %v139
  %v141 = vpop.f32.mrb[0].mxu0
  %v142 = vpop.f32.mrb[0].mxu0
  %v143 = vadd.f32 %v53, %v142
  %v144 = vpop.f32.mrb[0].mxu0
  %145 = vmatprep.mubr.bf16.mxu0 0
  %146 = vmatmul.mubr.bf16.gmra.mrb[0].mxu0 %v88
  %v147 = vpop.f32.mrb[0].mxu0
  %v148 = vadd.f32 %v53, %v147
  %v149 = vpop.f32.mrb[0].mxu0
  %v150 = vpop.f32.mrb[0].mxu0
  %v151 = vadd.f32 %v53, %v150
  %v152 = vpop.f32.mrb[0].mxu0
  %153 = vmatprep.mubr.bf16.mxu0 0
  %154 = vmatmul.mubr.bf16.gmra.mrb[0].mxu0 %v91
  %v155 = vpop.f32.mrb[0].mxu0
  %v156 = vadd.f32 %v53, %v155
  %v157 = vpop.f32.mrb[0].mxu0
  %v158 = vpop.f32.mrb[0].mxu0
  %v159 = vadd.f32 %v53, %v158
  %v160 = vpop.f32.mrb[0].mxu0
  %161 = vdwg.mxu0
  %v162 = vld [vmem:[%s8] sm:$0xf]
  %v163 = vld [vmem:[%s8 + $0x4] sm:$0x1]
  %v164 = vld [vmem:[#allocation2] sm:$0x1]
  %v166 = vlaneseq
  %v167 = vshrl.u32 %v166, 7
  %v168 = vsub.s32 0, %v167
  %v169 = vrot.slane %v164, %v168
  %v173 = vunpack.c.l.b16 %v162
  %v174 = vunpack.c.l.b16 %v163
  %v175 = vpack.c.b16 %v174, %v173
  %v177 = vsel %vm80, %v45, 0
  %v180 = vsel %vm93, %v175, 0
  %182 = vmatprep.subr.bf16.mxu0 0
  %183 = vmatpush1.bf16.msra.mxu0 %v180
  %184 = vmatprep.subr.bf16.mxu0 0
  %185 = vmatpush1.bf16.msra.mxu0 0
  %186 = vmatprep.subr.bf16.mxu0 0
  %187 = vmatpush1.bf16.msra.mxu0 0
  %188 = vmatprep.subr.bf16.mxu0 0
  %189 = vmatpush1.bf16.msra.mxu0 0
  %190 = vmatprep.subr.bf16.mxu0 0
  %191 = vmatpush1.bf16.msra.mxu0 0
  %192 = vmatprep.subr.bf16.mxu0 0
  %193 = vmatpush1.bf16.msra.mxu0 0
  %194 = vmatprep.subr.bf16.mxu0 0
  %195 = vmatpush1.bf16.msra.mxu0 0
  %196 = vmatprep.subr.bf16.mxu0 0
  %197 = vmatpush1.bf16.msra.mxu0 0
  %198 = vmatprep.subr.bf16.mxu0 0
  %199 = vmatpush1.bf16.msra.mxu0 0
  %200 = vmatprep.subr.bf16.mxu0 0
  %201 = vmatpush1.bf16.msra.mxu0 0
  %202 = vmatprep.subr.bf16.mxu0 0
  %203 = vmatpush1.bf16.msra.mxu0 0
  %204 = vmatprep.subr.bf16.mxu0 0
  %205 = vmatpush1.bf16.msra.mxu0 0
  %206 = vmatprep.subr.bf16.mxu0 0
  %207 = vmatpush1.bf16.msra.mxu0 0
  %208 = vmatprep.subr.bf16.mxu0 0
  %209 = vmatpush1.bf16.msra.mxu0 0
  %210 = vmatprep.subr.bf16.mxu0 0
  %211 = vmatpush1.bf16.msra.mxu0 0
  %212 = vmatprep.subr.bf16.mxu0 0
  %213 = vmatpush1.bf16.msra.mxu0 0
  %214 = vmatprep.mubr.bf16.mxu0 0
  %215 = vmatmul.mubr.bf16.gmra.mrb[0].mxu0 %v177
  %v216 = vpop.f32.mrb[0].mxu0
  %v217 = vadd.f32 %v169, %v216
  %v218 = vpop.f32.mrb[0].mxu0
  %v219 = vpop.f32.mrb[0].mxu0
  %v220 = vpop.f32.mrb[0].mxu0
  %221 = vdwg.mxu0
  %v222 = vld [vmem:[%s3] sm:$0xf]
  %v223 = vld [vmem:[%s3 + $0x4] sm:$0xf]
  %v224 = vld [vmem:[%s3 + $0x8] sm:$0xf]
  %v225 = vld [vmem:[%s3 + $0xc] sm:$0xf]
  %v226 = vld [vmem:[%s4] sm:$0xf]
  %v227 = vld [vmem:[%s4 + $0x4] sm:$0xf]
  %v228 = vld [vmem:[%s4 + $0x8] sm:$0xf]
  %v229 = vld [vmem:[%s4 + $0xc] sm:$0xf]
  %v230 = vld [vmem:[%s5] sm:$0xf]
  %v231 = vld [vmem:[%s5 + $0x4] sm:$0xf]
  %v232 = vld [vmem:[%s5 + $0x8] sm:$0xf]
  %v233 = vld [vmem:[%s5 + $0xc] sm:$0xf]
  %v234 = vld [vmem:[%s6] sm:$0x1]
  %v239 = vunpack.c.l.b16 %v222
  %v240 = vunpack.c.l.b16 %v223
  %v241 = vunpack.c.l.b16 %v224
  %v242 = vunpack.c.l.b16 %v225
  %v243 = vpack.c.b16 %v240, %v239
  %v244 = vpack.c.b16 %v242, %v241
  %vm247 = vcmask 261120
  %v249 = vsel %vm247, 0, 0
  %251 = vmatprep.subr.bf16.mxu0 0
  %252 = vmatpush1.bf16.msra.mxu0 %v243
  %253 = vmatprep.subr.bf16.mxu0 0
  %254 = vmatpush1.bf16.msra.mxu0 %v244
  %255 = vmatprep.subr.bf16.mxu0 0
  %256 = vmatpush1.bf16.msra.mxu0 0
  %257 = vmatprep.subr.bf16.mxu0 0
  %258 = vmatpush1.bf16.msra.mxu0 0
  %259 = vmatprep.subr.bf16.mxu0 0
  %260 = vmatpush1.bf16.msra.mxu0 0
  %261 = vmatprep.subr.bf16.mxu0 0
  %262 = vmatpush1.bf16.msra.mxu0 0
  %263 = vmatprep.subr.bf16.mxu0 0
  %264 = vmatpush1.bf16.msra.mxu0 0
  %265 = vmatprep.subr.bf16.mxu0 0
  %266 = vmatpush1.bf16.msra.mxu0 0
  %267 = vmatprep.subr.bf16.mxu0 0
  %268 = vmatpush1.bf16.msra.mxu0 0
  %269 = vmatprep.subr.bf16.mxu0 0
  %270 = vmatpush1.bf16.msra.mxu0 0
  %271 = vmatprep.subr.bf16.mxu0 0
  %272 = vmatpush1.bf16.msra.mxu0 0
  %273 = vmatprep.subr.bf16.mxu0 0
  %274 = vmatpush1.bf16.msra.mxu0 0
  %275 = vmatprep.subr.bf16.mxu0 0
  %276 = vmatpush1.bf16.msra.mxu0 0
  %277 = vmatprep.subr.bf16.mxu0 0
  %278 = vmatpush1.bf16.msra.mxu0 0
  %279 = vmatprep.subr.bf16.mxu0 0
  %280 = vmatpush1.bf16.msra.mxu0 0
  %281 = vmatprep.subr.bf16.mxu0 0
  %282 = vmatpush1.bf16.msra.mxu0 0
  %283 = vmatprep.mubr.bf16.mxu0 0
  %284 = vmatmul.mubr.bf16.gmra.mrb[0].mxu0 %v249
  %v285 = vpop.f32.mrb[0].mxu0
  %v286 = vadd.f32 0.0, %v285
  %v287 = vpop.f32.mrb[0].mxu0
  %v288 = vpop.f32.mrb[0].mxu0
  %v289 = vpop.f32.mrb[0].mxu0
  %290 = vdwg.mxu0
  %v291 = vadd.f32 %v132, %v286
  %v292 = vtanh.pop %v291
  %v293 = vmul.f32 %v292, 0.5
  %v294 = vadd.f32 %v293, 0.5
  %v295 = vmul.f32 %v294, 0.0
  %297 = vrot.lane.b32.xlu0 %v292, 64
  %v298 = vpop.permute.xlu0 %297
  %v300 = vmul.f32 %v294, %v298
  %302 = vrot.lane.b32.xlu0 %v300, 32
  %v303 = vpop.permute.xlu0 %302
  %v305 = vadd.f32 %v295, %v303
  %v306 = vtanh.pop %v305
  %308 = vrot.lane.b32.xlu0 %v306, 64
  %v309 = vpop.permute.xlu0 %308
  %v311 = vmul.f32 %v294, %v309
  %v312 = vpack.c.bf16 %v311, %v311
  %314 = vrot.lane.b32.xlu0 %v312, 32
  %v315 = vpop.permute.xlu0 %314
  %v320 = vunpack.c.l.b16 %v226
  %v321 = vunpack.c.l.b16 %v227
  %v322 = vunpack.c.l.b16 %v228
  %v323 = vunpack.c.l.b16 %v229
  %v324 = vpack.c.b16 %v321, %v320
  %v325 = vpack.c.b16 %v323, %v322
  %v329 = vsel %vm247, %v315, 0
  %331 = vmatprep.subr.bf16.mxu0 0
  %332 = vmatpush1.bf16.msra.mxu0 %v324
  %333 = vmatprep.subr.bf16.mxu0 0
  %334 = vmatpush1.bf16.msra.mxu0 %v325
  %335 = vmatprep.subr.bf16.mxu0 0
  %336 = vmatpush1.bf16.msra.mxu0 0
  %337 = vmatprep.subr.bf16.mxu0 0
  %338 = vmatpush1.bf16.msra.mxu0 0
  %339 = vmatprep.subr.bf16.mxu0 0
  %340 = vmatpush1.bf16.msra.mxu0 0
  %341 = vmatprep.subr.bf16.mxu0 0
  %342 = vmatpush1.bf16.msra.mxu0 0
  %343 = vmatprep.subr.bf16.mxu0 0
  %344 = vmatpush1.bf16.msra.mxu0 0
  %345 = vmatprep.subr.bf16.mxu0 0
  %346 = vmatpush1.bf16.msra.mxu0 0
  %347 = vmatprep.subr.bf16.mxu0 0
  %348 = vmatpush1.bf16.msra.mxu0 0
  %349 = vmatprep.subr.bf16.mxu0 0
  %350 = vmatpush1.bf16.msra.mxu0 0
  %351 = vmatprep.subr.bf16.mxu0 0
  %352 = vmatpush1.bf16.msra.mxu0 0
  %353 = vmatprep.subr.bf16.mxu0 0
  %354 = vmatpush1.bf16.msra.mxu0 0
  %355 = vmatprep.subr.bf16.mxu0 0
  %356 = vmatpush1.bf16.msra.mxu0 0
  %357 = vmatprep.subr.bf16.mxu0 0
  %358 = vmatpush1.bf16.msra.mxu0 0
  %359 = vmatprep.subr.bf16.mxu0 0
  %360 = vmatpush1.bf16.msra.mxu0 0
  %361 = vmatprep.subr.bf16.mxu0 0
  %362 = vmatpush1.bf16.msra.mxu0 0
  %363 = vmatprep.mubr.bf16.mxu0 0
  %364 = vmatmul.mubr.bf16.gmra.mrb[0].mxu0 %v329
  %v365 = vpop.f32.mrb[0].mxu0
  %v366 = vadd.f32 0.0, %v365
  %v367 = vpop.f32.mrb[0].mxu0
  %v368 = vpop.f32.mrb[0].mxu0
  %v369 = vpop.f32.mrb[0].mxu0
  %370 = vdwg.mxu0
  %v372 = vlaneseq
  %v373 = vshrl.u32 %v372, 7
  %v374 = vsub.s32 0, %v373
  %v375 = vrot.slane %v234, %v374
  %v377 = vadd.f32 %v375, %v366
  %v382 = vunpack.c.l.b16 %v230
  %v383 = vunpack.c.l.b16 %v231
  %v384 = vunpack.c.l.b16 %v232
  %v385 = vunpack.c.l.b16 %v233
  %v386 = vpack.c.b16 %v383, %v382
  %v387 = vpack.c.b16 %v385, %v384
  %390 = vmatprep.subr.bf16.mxu0 0
  %391 = vmatpush1.bf16.msra.mxu0 %v386
  %392 = vmatprep.subr.bf16.mxu0 0
  %393 = vmatpush1.bf16.msra.mxu0 %v387
  %394 = vmatprep.subr.bf16.mxu0 0
  %395 = vmatpush1.bf16.msra.mxu0 0
  %396 = vmatprep.subr.bf16.mxu0 0
  %397 = vmatpush1.bf16.msra.mxu0 0
  %398 = vmatprep.subr.bf16.mxu0 0
  %399 = vmatpush1.bf16.msra.mxu0 0
  %400 = vmatprep.subr.bf16.mxu0 0
  %401 = vmatpush1.bf16.msra.mxu0 0
  %402 = vmatprep.subr.bf16.mxu0 0
  %403 = vmatpush1.bf16.msra.mxu0 0
  %404 = vmatprep.subr.bf16.mxu0 0
  %405 = vmatpush1.bf16.msra.mxu0 0
  %406 = vmatprep.subr.bf16.mxu0 0
  %407 = vmatpush1.bf16.msra.mxu0 0
  %408 = vmatprep.subr.bf16.mxu0 0
  %409 = vmatpush1.bf16.msra.mxu0 0
  %410 = vmatprep.subr.bf16.mxu0 0
  %411 = vmatpush1.bf16.msra.mxu0 0
  %412 = vmatprep.subr.bf16.mxu0 0
  %413 = vmatpush1.bf16.msra.mxu0 0
  %414 = vmatprep.subr.bf16.mxu0 0
  %415 = vmatpush1.bf16.msra.mxu0 0
  %416 = vmatprep.subr.bf16.mxu0 0
  %417 = vmatpush1.bf16.msra.mxu0 0
  %418 = vmatprep.subr.bf16.mxu0 0
  %419 = vmatpush1.bf16.msra.mxu0 0
  %420 = vmatprep.subr.bf16.mxu0 0
  %421 = vmatpush1.bf16.msra.mxu0 0
  %422 = vmatprep.mubr.bf16.mxu0 0
  %423 = vmatmul.mubr.bf16.gmra.mrb[0].mxu0 %v249
  %v424 = vpop.f32.mrb[0].mxu0
  %v425 = vadd.f32 0.0, %v424
  %v426 = vpop.f32.mrb[0].mxu0
  %v427 = vpop.f32.mrb[0].mxu0
  %v428 = vpop.f32.mrb[0].mxu0
  %429 = vdwg.mxu0
  %v430 = vadd.f32 %v377, %v425
  %v431 = vtanh.pop %v430
  %v432 = vmul.f32 %v431, 0.5
  %v433 = vadd.f32 %v432, 0.5
  %v434 = vmul.f32 %v433, 0.0
  %436 = vrot.lane.b32.xlu0 %v431, 64
  %v437 = vpop.permute.xlu0 %436
  %v439 = vmul.f32 %v433, %v437
  %441 = vrot.lane.b32.xlu0 %v439, 32
  %v442 = vpop.permute.xlu0 %441
  %v444 = vadd.f32 %v434, %v442
  %v445 = vtanh.pop %v444
  %447 = vrot.lane.b32.xlu0 %v445, 64
  %v448 = vpop.permute.xlu0 %447
  %v450 = vmul.f32 %v433, %v448
  %v451 = vpack.c.bf16 %v450, %v450
  %452 = vmatprep.subr.bf16.mxu0 0
  %453 = vmatpush1.bf16.msra.mxu0 %v243
  %454 = vmatprep.subr.bf16.mxu0 0
  %455 = vmatpush1.bf16.msra.mxu0 %v244
  %456 = vmatprep.subr.bf16.mxu0 0
  %457 = vmatpush1.bf16.msra.mxu0 0
  %458 = vmatprep.subr.bf16.mxu0 0
  %459 = vmatpush1.bf16.msra.mxu0 0
  %460 = vmatprep.subr.bf16.mxu0 0
  %461 = vmatpush1.bf16.msra.mxu0 0
  %462 = vmatprep.subr.bf16.mxu0 0
  %463 = vmatpush1.bf16.msra.mxu0 0
  %464 = vmatprep.subr.bf16.mxu0 0
  %465 = vmatpush1.bf16.msra.mxu0 0
  %466 = vmatprep.subr.bf16.mxu0 0
  %467 = vmatpush1.bf16.msra.mxu0 0
  %468 = vmatprep.subr.bf16.mxu0 0
  %469 = vmatpush1.bf16.msra.mxu0 0
  %470 = vmatprep.subr.bf16.mxu0 0
  %471 = vmatpush1.bf16.msra.mxu0 0
  %472 = vmatprep.subr.bf16.mxu0 0
  %473 = vmatpush1.bf16.msra.mxu0 0
  %474 = vmatprep.subr.bf16.mxu0 0
  %475 = vmatpush1.bf16.msra.mxu0 0
  %476 = vmatprep.subr.bf16.mxu0 0
  %477 = vmatpush1.bf16.msra.mxu0 0
  %478 = vmatprep.subr.bf16.mxu0 0
  %479 = vmatpush1.bf16.msra.mxu0 0
  %480 = vmatprep.subr.bf16.mxu0 0
  %481 = vmatpush1.bf16.msra.mxu0 0
  %482 = vmatprep.subr.bf16.mxu0 0
  %483 = vmatpush1.bf16.msra.mxu0 0
  %484 = vmatprep.mubr.bf16.mxu0 0
  %485 = vmatmul.mubr.bf16.gmra.mrb[0].mxu0 %v329
  %v486 = vpop.f32.mrb[0].mxu0
  %v487 = vadd.f32 0.0, %v486
  %v488 = vpop.f32.mrb[0].mxu0
  %v489 = vpop.f32.mrb[0].mxu0
  %v490 = vpop.f32.mrb[0].mxu0
  %491 = vdwg.mxu0
  %v492 = vadd.f32 %v135, %v487
  %v493 = vtanh.pop %v492
  %v494 = vmul.f32 %v493, 0.5
  %v495 = vadd.f32 %v494, 0.5
  %v496 = vmul.f32 %v495, %v305
  %498 = vrot.lane.b32.xlu0 %v493, 64
  %v499 = vpop.permute.xlu0 %498
  %v501 = vmul.f32 %v495, %v499
  %503 = vrot.lane.b32.xlu0 %v501, 32
  %v504 = vpop.permute.xlu0 %503
  %v506 = vadd.f32 %v496, %v504
  %v507 = vtanh.pop %v506
  %509 = vrot.lane.b32.xlu0 %v507, 64
  %v510 = vpop.permute.xlu0 %509
  %v512 = vmul.f32 %v495, %v510
  %v513 = vpack.c.bf16 %v512, %v512
  %515 = vrot.lane.b32.xlu0 %v513, 32
  %v516 = vpop.permute.xlu0 %515
  %v518 = vsel %vm247, %v516, 0
  %520 = vmatprep.subr.bf16.mxu0 0
  %521 = vmatpush1.bf16.msra.mxu0 %v324
  %522 = vmatprep.subr.bf16.mxu0 0
  %523 = vmatpush1.bf16.msra.mxu0 %v325
  %524 = vmatprep.subr.bf16.mxu0 0
  %525 = vmatpush1.bf16.msra.mxu0 0
  %526 = vmatprep.subr.bf16.mxu0 0
  %527 = vmatpush1.bf16.msra.mxu0 0
  %528 = vmatprep.subr.bf16.mxu0 0
  %529 = vmatpush1.bf16.msra.mxu0 0
  %530 = vmatprep.subr.bf16.mxu0 0
  %531 = vmatpush1.bf16.msra.mxu0 0
  %532 = vmatprep.subr.bf16.mxu0 0
  %533 = vmatpush1.bf16.msra.mxu0 0
  %534 = vmatprep.subr.bf16.mxu0 0
  %535 = vmatpush1.bf16.msra.mxu0 0
  %536 = vmatprep.subr.bf16.mxu0 0
  %537 = vmatpush1.bf16.msra.mxu0 0
  %538 = vmatprep.subr.bf16.mxu0 0
  %539 = vmatpush1.bf16.msra.mxu0 0
  %540 = vmatprep.subr.bf16.mxu0 0
  %541 = vmatpush1.bf16.msra.mxu0 0
  %542 = vmatprep.subr.bf16.mxu0 0
  %543 = vmatpush1.bf16.msra.mxu0 0
  %544 = vmatprep.subr.bf16.mxu0 0
  %545 = vmatpush1.bf16.msra.mxu0 0
  %546 = vmatprep.subr.bf16.mxu0 0
  %547 = vmatpush1.bf16.msra.mxu0 0
  %548 = vmatprep.subr.bf16.mxu0 0
  %549 = vmatpush1.bf16.msra.mxu0 0
  %550 = vmatprep.subr.bf16.mxu0 0
  %551 = vmatpush1.bf16.msra.mxu0 0
  %552 = vmatprep.mubr.bf16.mxu0 0
  %553 = vmatmul.mubr.bf16.gmra.mrb[0].mxu0 %v518
  %v554 = vpop.f32.mrb[0].mxu0
  %v555 = vadd.f32 0.0, %v554
  %v556 = vpop.f32.mrb[0].mxu0
  %v557 = vpop.f32.mrb[0].mxu0
  %v558 = vpop.f32.mrb[0].mxu0
  %559 = vdwg.mxu0
  %v560 = vadd.f32 %v375, %v555
  %562 = vrot.lane.b32.xlu0 %v451, 32
  %v563 = vpop.permute.xlu0 %562
  %v565 = vsel %vm247, %v563, 0
  %567 = vmatprep.subr.bf16.mxu0 0
  %568 = vmatpush1.bf16.msra.mxu0 %v386
  %569 = vmatprep.subr.bf16.mxu0 0
  %570 = vmatpush1.bf16.msra.mxu0 %v387
  %571 = vmatprep.subr.bf16.mxu0 0
  %572 = vmatpush1.bf16.msra.mxu0 0
  %573 = vmatprep.subr.bf16.mxu0 0
  %574 = vmatpush1.bf16.msra.mxu0 0
  %575 = vmatprep.subr.bf16.mxu0 0
  %576 = vmatpush1.bf16.msra.mxu0 0
  %577 = vmatprep.subr.bf16.mxu0 0
  %578 = vmatpush1.bf16.msra.mxu0 0
  %579 = vmatprep.subr.bf16.mxu0 0
  %580 = vmatpush1.bf16.msra.mxu0 0
  %581 = vmatprep.subr.bf16.mxu0 0
  %582 = vmatpush1.bf16.msra.mxu0 0
  %583 = vmatprep.subr.bf16.mxu0 0
  %584 = vmatpush1.bf16.msra.mxu0 0
  %585 = vmatprep.subr.bf16.mxu0 0
  %586 = vmatpush1.bf16.msra.mxu0 0
  %587 = vmatprep.subr.bf16.mxu0 0
  %588 = vmatpush1.bf16.msra.mxu0 0
  %589 = vmatprep.subr.bf16.mxu0 0
  %590 = vmatpush1.bf16.msra.mxu0 0
  %591 = vmatprep.subr.bf16.mxu0 0
  %592 = vmatpush1.bf16.msra.mxu0 0
  %593 = vmatprep.subr.bf16.mxu0 0
  %594 = vmatpush1.bf16.msra.mxu0 0
  %595 = vmatprep.subr.bf16.mxu0 0
  %596 = vmatpush1.bf16.msra.mxu0 0
  %597 = vmatprep.subr.bf16.mxu0 0
  %598 = vmatpush1.bf16.msra.mxu0 0
  %599 = vmatprep.mubr.bf16.mxu0 0
  %600 = vmatmul.mubr.bf16.gmra.mrb[0].mxu0 %v565
  %v601 = vpop.f32.mrb[0].mxu0
  %v602 = vadd.f32 0.0, %v601
  %v603 = vpop.f32.mrb[0].mxu0
  %v604 = vpop.f32.mrb[0].mxu0
  %v605 = vpop.f32.mrb[0].mxu0
  %606 = vdwg.mxu0
  %v607 = vadd.f32 %v560, %v602
  %v608 = vtanh.pop %v607
  %v609 = vmul.f32 %v608, 0.5
  %v610 = vadd.f32 %v609, 0.5
  %v611 = vmul.f32 %v610, %v444
  %613 = vrot.lane.b32.xlu0 %v608, 64
  %v614 = vpop.permute.xlu0 %613
  %v616 = vmul.f32 %v610, %v614
  %618 = vrot.lane.b32.xlu0 %v616, 32
  %v619 = vpop.permute.xlu0 %618
  %v621 = vadd.f32 %v611, %v619
  %v622 = vtanh.pop %v621
  %624 = vrot.lane.b32.xlu0 %v622, 64
  %v625 = vpop.permute.xlu0 %624
  %v627 = vmul.f32 %v610, %v625
  %v628 = vpack.c.bf16 %v627, %v627
  %629 = vmatprep.subr.bf16.mxu0 0
  %630 = vmatpush1.bf16.msra.mxu0 %v243
  %631 = vmatprep.subr.bf16.mxu0 0
  %632 = vmatpush1.bf16.msra.mxu0 %v244
  %633 = vmatprep.subr.bf16.mxu0 0
  %634 = vmatpush1.bf16.msra.mxu0 0
  %635 = vmatprep.subr.bf16.mxu0 0
  %636 = vmatpush1.bf16.msra.mxu0 0
  %637 = vmatprep.subr.bf16.mxu0 0
  %638 = vmatpush1.bf16.msra.mxu0 0
  %639 = vmatprep.subr.bf16.mxu0 0
  %640 = vmatpush1.bf16.msra.mxu0 0
  %641 = vmatprep.subr.bf16.mxu0 0
  %642 = vmatpush1.bf16.msra.mxu0 0
  %643 = vmatprep.subr.bf16.mxu0 0
  %644 = vmatpush1.bf16.msra.mxu0 0
  %645 = vmatprep.subr.bf16.mxu0 0
  %646 = vmatpush1.bf16.msra.mxu0 0
  %647 = vmatprep.subr.bf16.mxu0 0
  %648 = vmatpush1.bf16.msra.mxu0 0
  %649 = vmatprep.subr.bf16.mxu0 0
  %650 = vmatpush1.bf16.msra.mxu0 0
  %651 = vmatprep.subr.bf16.mxu0 0
  %652 = vmatpush1.bf16.msra.mxu0 0
  %653 = vmatprep.subr.bf16.mxu0 0
  %654 = vmatpush1.bf16.msra.mxu0 0
  %655 = vmatprep.subr.bf16.mxu0 0
  %656 = vmatpush1.bf16.msra.mxu0 0
  %657 = vmatprep.subr.bf16.mxu0 0
  %658 = vmatpush1.bf16.msra.mxu0 0
  %659 = vmatprep.subr.bf16.mxu0 0
  %660 = vmatpush1.bf16.msra.mxu0 0
  %661 = vmatprep.mubr.bf16.mxu0 0
  %662 = vmatmul.mubr.bf16.gmra.mrb[0].mxu0 %v518
  %v663 = vpop.f32.mrb[0].mxu0
  %v664 = vadd.f32 0.0, %v663
  %v665 = vpop.f32.mrb[0].mxu0
  %v666 = vpop.f32.mrb[0].mxu0
  %v667 = vpop.f32.mrb[0].mxu0
  %668 = vdwg.mxu0
  %v669 = vadd.f32 %v140, %v664
  %v670 = vtanh.pop %v669
  %v671 = vmul.f32 %v670, 0.5
  %v672 = vadd.f32 %v671, 0.5
  %v673 = vmul.f32 %v672, %v506
  %675 = vrot.lane.b32.xlu0 %v670, 64
  %v676 = vpop.permute.xlu0 %675
  %v678 = vmul.f32 %v672, %v676
  %680 = vrot.lane.b32.xlu0 %v678, 32
  %v681 = vpop.permute.xlu0 %680
  %v683 = vadd.f32 %v673, %v681
  %v684 = vtanh.pop %v683
  %686 = vrot.lane.b32.xlu0 %v684, 64
  %v687 = vpop.permute.xlu0 %686
  %v689 = vmul.f32 %v672, %v687
  %v690 = vpack.c.bf16 %v689, %v689
  %692 = vrot.lane.b32.xlu0 %v690, 32
  %v693 = vpop.permute.xlu0 %692
  %v695 = vsel %vm247, %v693, 0
  %697 = vmatprep.subr.bf16.mxu0 0
  %698 = vmatpush1.bf16.msra.mxu0 %v324
  %699 = vmatprep.subr.bf16.mxu0 0
  %700 = vmatpush1.bf16.msra.mxu0 %v325
  %701 = vmatprep.subr.bf16.mxu0 0
  %702 = vmatpush1.bf16.msra.mxu0 0
  %703 = vmatprep.subr.bf16.mxu0 0
  %704 = vmatpush1.bf16.msra.mxu0 0
  %705 = vmatprep.subr.bf16.mxu0 0
  %706 = vmatpush1.bf16.msra.mxu0 0
  %707 = vmatprep.subr.bf16.mxu0 0
  %708 = vmatpush1.bf16.msra.mxu0 0
  %709 = vmatprep.subr.bf16.mxu0 0
  %710 = vmatpush1.bf16.msra.mxu0 0
  %711 = vmatprep.subr.bf16.mxu0 0
  %712 = vmatpush1.bf16.msra.mxu0 0
  %713 = vmatprep.subr.bf16.mxu0 0
  %714 = vmatpush1.bf16.msra.mxu0 0
  %715 = vmatprep.subr.bf16.mxu0 0
  %716 = vmatpush1.bf16.msra.mxu0 0
  %717 = vmatprep.subr.bf16.mxu0 0
  %718 = vmatpush1.bf16.msra.mxu0 0
  %719 = vmatprep.subr.bf16.mxu0 0
  %720 = vmatpush1.bf16.msra.mxu0 0
  %721 = vmatprep.subr.bf16.mxu0 0
  %722 = vmatpush1.bf16.msra.mxu0 0
  %723 = vmatprep.subr.bf16.mxu0 0
  %724 = vmatpush1.bf16.msra.mxu0 0
  %725 = vmatprep.subr.bf16.mxu0 0
  %726 = vmatpush1.bf16.msra.mxu0 0
  %727 = vmatprep.subr.bf16.mxu0 0
  %728 = vmatpush1.bf16.msra.mxu0 0
  %729 = vmatprep.mubr.bf16.mxu0 0
  %730 = vmatmul.mubr.bf16.gmra.mrb[0].mxu0 %v695
  %v731 = vpop.f32.mrb[0].mxu0
  %v732 = vadd.f32 0.0, %v731
  %v733 = vpop.f32.mrb[0].mxu0
  %v734 = vpop.f32.mrb[0].mxu0
  %v735 = vpop.f32.mrb[0].mxu0
  %736 = vdwg.mxu0
  %v737 = vadd.f32 %v375, %v732
  %739 = vrot.lane.b32.xlu0 %v628, 32
  %v740 = vpop.permute.xlu0 %739
  %v742 = vsel %vm247, %v740, 0
  %744 = vmatprep.subr.bf16.mxu0 0
  %745 = vmatpush1.bf16.msra.mxu0 %v386
  %746 = vmatprep.subr.bf16.mxu0 0
  %747 = vmatpush1.bf16.msra.mxu0 %v387
  %748 = vmatprep.subr.bf16.mxu0 0
  %749 = vmatpush1.bf16.msra.mxu0 0
  %750 = vmatprep.subr.bf16.mxu0 0
  %751 = vmatpush1.bf16.msra.mxu0 0
  %752 = vmatprep.subr.bf16.mxu0 0
  %753 = vmatpush1.bf16.msra.mxu0 0
  %754 = vmatprep.subr.bf16.mxu0 0
  %755 = vmatpush1.bf16.msra.mxu0 0
  %756 = vmatprep.subr.bf16.mxu0 0
  %757 = vmatpush1.bf16.msra.mxu0 0
  %758 = vmatprep.subr.bf16.mxu0 0
  %759 = vmatpush1.bf16.msra.mxu0 0
  %760 = vmatprep.subr.bf16.mxu0 0
  %761 = vmatpush1.bf16.msra.mxu0 0
  %762 = vmatprep.subr.bf16.mxu0 0
  %763 = vmatpush1.bf16.msra.mxu0 0
  %764 = vmatprep.subr.bf16.mxu0 0
  %765 = vmatpush1.bf16.msra.mxu0 0
  %766 = vmatprep.subr.bf16.mxu0 0
  %767 = vmatpush1.bf16.msra.mxu0 0
  %768 = vmatprep.subr.bf16.mxu0 0
  %769 = vmatpush1.bf16.msra.mxu0 0
  %770 = vmatprep.subr.bf16.mxu0 0
  %771 = vmatpush1.bf16.msra.mxu0 0
  %772 = vmatprep.subr.bf16.mxu0 0
  %773 = vmatpush1.bf16.msra.mxu0 0
  %774 = vmatprep.subr.bf16.mxu0 0
  %775 = vmatpush1.bf16.msra.mxu0 0
  %776 = vmatprep.mubr.bf16.mxu0 0
  %777 = vmatmul.mubr.bf16.gmra.mrb[0].mxu0 %v742
  %v778 = vpop.f32.mrb[0].mxu0
  %v779 = vadd.f32 0.0, %v778
  %v780 = vpop.f32.mrb[0].mxu0
  %v781 = vpop.f32.mrb[0].mxu0
  %v782 = vpop.f32.mrb[0].mxu0
  %783 = vdwg.mxu0
  %v784 = vadd.f32 %v737, %v779
  %v785 = vtanh.pop %v784
  %v786 = vmul.f32 %v785, 0.5
  %v787 = vadd.f32 %v786, 0.5
  %v788 = vmul.f32 %v787, %v621
  %790 = vrot.lane.b32.xlu0 %v785, 64
  %v791 = vpop.permute.xlu0 %790
  %v793 = vmul.f32 %v787, %v791
  %795 = vrot.lane.b32.xlu0 %v793, 32
  %v796 = vpop.permute.xlu0 %795
  %v798 = vadd.f32 %v788, %v796
  %v799 = vtanh.pop %v798
  %801 = vrot.lane.b32.xlu0 %v799, 64
  %v802 = vpop.permute.xlu0 %801
  %v804 = vmul.f32 %v787, %v802
  %v805 = vpack.c.bf16 %v804, %v804
  %806 = vmatprep.subr.bf16.mxu0 0
  %807 = vmatpush1.bf16.msra.mxu0 %v243
  %808 = vmatprep.subr.bf16.mxu0 0
  %809 = vmatpush1.bf16.msra.mxu0 %v244
  %810 = vmatprep.subr.bf16.mxu0 0
  %811 = vmatpush1.bf16.msra.mxu0 0
  %812 = vmatprep.subr.bf16.mxu0 0
  %813 = vmatpush1.bf16.msra.mxu0 0
  %814 = vmatprep.subr.bf16.mxu0 0
  %815 = vmatpush1.bf16.msra.mxu0 0
  %816 = vmatprep.subr.bf16.mxu0 0
  %817 = vmatpush1.bf16.msra.mxu0 0
  %818 = vmatprep.subr.bf16.mxu0 0
  %819 = vmatpush1.bf16.msra.mxu0 0
  %820 = vmatprep.subr.bf16.mxu0 0
  %821 = vmatpush1.bf16.msra.mxu0 0
  %822 = vmatprep.subr.bf16.mxu0 0
  %823 = vmatpush1.bf16.msra.mxu0 0
  %824 = vmatprep.subr.bf16.mxu0 0
  %825 = vmatpush1.bf16.msra.mxu0 0
  %826 = vmatprep.subr.bf16.mxu0 0
  %827 = vmatpush1.bf16.msra.mxu0 0
  %828 = vmatprep.subr.bf16.mxu0 0
  %829 = vmatpush1.bf16.msra.mxu0 0
  %830 = vmatprep.subr.bf16.mxu0 0
  %831 = vmatpush1.bf16.msra.mxu0 0
  %832 = vmatprep.subr.bf16.mxu0 0
  %833 = vmatpush1.bf16.msra.mxu0 0
  %834 = vmatprep.subr.bf16.mxu0 0
  %835 = vmatpush1.bf16.msra.mxu0 0
  %836 = vmatprep.subr.bf16.mxu0 0
  %837 = vmatpush1.bf16.msra.mxu0 0
  %838 = vmatprep.mubr.bf16.mxu0 0
  %839 = vmatmul.mubr.bf16.gmra.mrb[0].mxu0 %v695
  %v840 = vpop.f32.mrb[0].mxu0
  %v841 = vadd.f32 0.0, %v840
  %v842 = vpop.f32.mrb[0].mxu0
  %v843 = vpop.f32.mrb[0].mxu0
  %v844 = vpop.f32.mrb[0].mxu0
  %845 = vdwg.mxu0
  %v846 = vadd.f32 %v143, %v841
  %v847 = vtanh.pop %v846
  %v848 = vmul.f32 %v847, 0.5
  %v849 = vadd.f32 %v848, 0.5
  %v850 = vmul.f32 %v849, %v683
  %852 = vrot.lane.b32.xlu0 %v847, 64
  %v853 = vpop.permute.xlu0 %852
  %v855 = vmul.f32 %v849, %v853
  %857 = vrot.lane.b32.xlu0 %v855, 32
  %v858 = vpop.permute.xlu0 %857
  %v860 = vadd.f32 %v850, %v858
  %v861 = vtanh.pop %v860
  %863 = vrot.lane.b32.xlu0 %v861, 64
  %v864 = vpop.permute.xlu0 %863
  %v866 = vmul.f32 %v849, %v864
  %v867 = vpack.c.bf16 %v866, %v866
  %869 = vrot.lane.b32.xlu0 %v867, 32
  %v870 = vpop.permute.xlu0 %869
  %v872 = vsel %vm247, %v870, 0
  %874 = vmatprep.subr.bf16.mxu0 0
  %875 = vmatpush1.bf16.msra.mxu0 %v324
  %876 = vmatprep.subr.bf16.mxu0 0
  %877 = vmatpush1.bf16.msra.mxu0 %v325
  %878 = vmatprep.subr.bf16.mxu0 0
  %879 = vmatpush1.bf16.msra.mxu0 0
  %880 = vmatprep.subr.bf16.mxu0 0
  %881 = vmatpush1.bf16.msra.mxu0 0
  %882 = vmatprep.subr.bf16.mxu0 0
  %883 = vmatpush1.bf16.msra.mxu0 0
  %884 = vmatprep.subr.bf16.mxu0 0
  %885 = vmatpush1.bf16.msra.mxu0 0
  %886 = vmatprep.subr.bf16.mxu0 0
  %887 = vmatpush1.bf16.msra.mxu0 0
  %888 = vmatprep.subr.bf16.mxu0 0
  %889 = vmatpush1.bf16.msra.mxu0 0
  %890 = vmatprep.subr.bf16.mxu0 0
  %891 = vmatpush1.bf16.msra.mxu0 0
  %892 = vmatprep.subr.bf16.mxu0 0
  %893 = vmatpush1.bf16.msra.mxu0 0
  %894 = vmatprep.subr.bf16.mxu0 0
  %895 = vmatpush1.bf16.msra.mxu0 0
  %896 = vmatprep.subr.bf16.mxu0 0
  %897 = vmatpush1.bf16.msra.mxu0 0
  %898 = vmatprep.subr.bf16.mxu0 0
  %899 = vmatpush1.bf16.msra.mxu0 0
  %900 = vmatprep.subr.bf16.mxu0 0
  %901 = vmatpush1.bf16.msra.mxu0 0
  %902 = vmatprep.subr.bf16.mxu0 0
  %903 = vmatpush1.bf16.msra.mxu0 0
  %904 = vmatprep.subr.bf16.mxu0 0
  %905 = vmatpush1.bf16.msra.mxu0 0
  %906 = vmatprep.mubr.bf16.mxu0 0
  %907 = vmatmul.mubr.bf16.gmra.mrb[0].mxu0 %v872
  %v908 = vpop.f32.mrb[0].mxu0
  %v909 = vadd.f32 0.0, %v908
  %v910 = vpop.f32.mrb[0].mxu0
  %v911 = vpop.f32.mrb[0].mxu0
  %v912 = vpop.f32.mrb[0].mxu0
  %913 = vdwg.mxu0
  %v914 = vadd.f32 %v375, %v909
  %916 = vrot.lane.b32.xlu0 %v805, 32
  %v917 = vpop.permute.xlu0 %916
  %v919 = vsel %vm247, %v917, 0
  %921 = vmatprep.subr.bf16.mxu0 0
  %922 = vmatpush1.bf16.msra.mxu0 %v386
  %923 = vmatprep.subr.bf16.mxu0 0
  %924 = vmatpush1.bf16.msra.mxu0 %v387
  %925 = vmatprep.subr.bf16.mxu0 0
  %926 = vmatpush1.bf16.msra.mxu0 0
  %927 = vmatprep.subr.bf16.mxu0 0
  %928 = vmatpush1.bf16.msra.mxu0 0
  %929 = vmatprep.subr.bf16.mxu0 0
  %930 = vmatpush1.bf16.msra.mxu0 0
  %931 = vmatprep.subr.bf16.mxu0 0
  %932 = vmatpush1.bf16.msra.mxu0 0
  %933 = vmatprep.subr.bf16.mxu0 0
  %934 = vmatpush1.bf16.msra.mxu0 0
  %935 = vmatprep.subr.bf16.mxu0 0
  %936 = vmatpush1.bf16.msra.mxu0 0
  %937 = vmatprep.subr.bf16.mxu0 0
  %938 = vmatpush1.bf16.msra.mxu0 0
  %939 = vmatprep.subr.bf16.mxu0 0
  %940 = vmatpush1.bf16.msra.mxu0 0
  %941 = vmatprep.subr.bf16.mxu0 0
  %942 = vmatpush1.bf16.msra.mxu0 0
  %943 = vmatprep.subr.bf16.mxu0 0
  %944 = vmatpush1.bf16.msra.mxu0 0
  %945 = vmatprep.subr.bf16.mxu0 0
  %946 = vmatpush1.bf16.msra.mxu0 0
  %947 = vmatprep.subr.bf16.mxu0 0
  %948 = vmatpush1.bf16.msra.mxu0 0
  %949 = vmatprep.subr.bf16.mxu0 0
  %950 = vmatpush1.bf16.msra.mxu0 0
  %951 = vmatprep.subr.bf16.mxu0 0
  %952 = vmatpush1.bf16.msra.mxu0 0
  %953 = vmatprep.mubr.bf16.mxu0 0
  %954 = vmatmul.mubr.bf16.gmra.mrb[0].mxu0 %v919
  %v955 = vpop.f32.mrb[0].mxu0
  %v956 = vadd.f32 0.0, %v955
  %v957 = vpop.f32.mrb[0].mxu0
  %v958 = vpop.f32.mrb[0].mxu0
  %v959 = vpop.f32.mrb[0].mxu0
  %960 = vdwg.mxu0
  %v961 = vadd.f32 %v914, %v956
  %v962 = vtanh.pop %v961
  %v963 = vmul.f32 %v962, 0.5
  %v964 = vadd.f32 %v963, 0.5
  %v965 = vmul.f32 %v964, %v798
  %967 = vrot.lane.b32.xlu0 %v962, 64
  %v968 = vpop.permute.xlu0 %967
  %v970 = vmul.f32 %v964, %v968
  %972 = vrot.lane.b32.xlu0 %v970, 32
  %v973 = vpop.permute.xlu0 %972
  %v975 = vadd.f32 %v965, %v973
  %v976 = vtanh.pop %v975
  %978 = vrot.lane.b32.xlu0 %v976, 64
  %v979 = vpop.permute.xlu0 %978
  %v981 = vmul.f32 %v964, %v979
  %v982 = vpack.c.bf16 %v981, %v981
  %983 = vmatprep.subr.bf16.mxu0 0
  %984 = vmatpush1.bf16.msra.mxu0 %v243
  %985 = vmatprep.subr.bf16.mxu0 0
  %986 = vmatpush1.bf16.msra.mxu0 %v244
  %987 = vmatprep.subr.bf16.mxu0 0
  %988 = vmatpush1.bf16.msra.mxu0 0
  %989 = vmatprep.subr.bf16.mxu0 0
  %990 = vmatpush1.bf16.msra.mxu0 0
  %991 = vmatprep.subr.bf16.mxu0 0
  %992 = vmatpush1.bf16.msra.mxu0 0
  %993 = vmatprep.subr.bf16.mxu0 0
  %994 = vmatpush1.bf16.msra.mxu0 0
  %995 = vmatprep.subr.bf16.mxu0 0
  %996 = vmatpush1.bf16.msra.mxu0 0
  %997 = vmatprep.subr.bf16.mxu0 0
  %998 = vmatpush1.bf16.msra.mxu0 0
  %999 = vmatprep.subr.bf16.mxu0 0
  %1000 = vmatpush1.bf16.msra.mxu0 0
  %1001 = vmatprep.subr.bf16.mxu0 0
  %1002 = vmatpush1.bf16.msra.mxu0 0
  %1003 = vmatprep.subr.bf16.mxu0 0
  %1004 = vmatpush1.bf16.msra.mxu0 0
  %1005 = vmatprep.subr.bf16.mxu0 0
  %1006 = vmatpush1.bf16.msra.mxu0 0
  %1007 = vmatprep.subr.bf16.mxu0 0
  %1008 = vmatpush1.bf16.msra.mxu0 0
  %1009 = vmatprep.subr.bf16.mxu0 0
  %1010 = vmatpush1.bf16.msra.mxu0 0
  %1011 = vmatprep.subr.bf16.mxu0 0
  %1012 = vmatpush1.bf16.msra.mxu0 0
  %1013 = vmatprep.subr.bf16.mxu0 0
  %1014 = vmatpush1.bf16.msra.mxu0 0
  %1015 = vmatprep.mubr.bf16.mxu0 0
  %1016 = vmatmul.mubr.bf16.gmra.mrb[0].mxu0 %v872
  %v1017 = vpop.f32.mrb[0].mxu0
  %v1018 = vadd.f32 0.0, %v1017
  %v1019 = vpop.f32.mrb[0].mxu0
  %v1020 = vpop.f32.mrb[0].mxu0
  %v1021 = vpop.f32.mrb[0].mxu0
  %1022 = vdwg.mxu0
  %v1023 = vadd.f32 %v148, %v1018
  %v1024 = vtanh.pop %v1023
  %v1025 = vmul.f32 %v1024, 0.5
  %v1026 = vadd.f32 %v1025, 0.5
  %v1027 = vmul.f32 %v1026, %v860
  %1029 = vrot.lane.b32.xlu0 %v1024, 64
  %v1030 = vpop.permute.xlu0 %1029
  %v1032 = vmul.f32 %v1026, %v1030
  %1034 = vrot.lane.b32.xlu0 %v1032, 32
  %v1035 = vpop.permute.xlu0 %1034
  %v1037 = vadd.f32 %v1027, %v1035
  %v1038 = vtanh.pop %v1037
  %1040 = vrot.lane.b32.xlu0 %v1038, 64
  %v1041 = vpop.permute.xlu0 %1040
  %v1043 = vmul.f32 %v1026, %v1041
  %v1044 = vpack.c.bf16 %v1043, %v1043
  %1046 = vrot.lane.b32.xlu0 %v1044, 32
  %v1047 = vpop.permute.xlu0 %1046
  %v1049 = vsel %vm247, %v1047, 0
  %1051 = vmatprep.subr.bf16.mxu0 0
  %1052 = vmatpush1.bf16.msra.mxu0 %v324
  %1053 = vmatprep.subr.bf16.mxu0 0
  %1054 = vmatpush1.bf16.msra.mxu0 %v325
  %1055 = vmatprep.subr.bf16.mxu0 0
  %1056 = vmatpush1.bf16.msra.mxu0 0
  %1057 = vmatprep.subr.bf16.mxu0 0
  %1058 = vmatpush1.bf16.msra.mxu0 0
  %1059 = vmatprep.subr.bf16.mxu0 0
  %1060 = vmatpush1.bf16.msra.mxu0 0
  %1061 = vmatprep.subr.bf16.mxu0 0
  %1062 = vmatpush1.bf16.msra.mxu0 0
  %1063 = vmatprep.subr.bf16.mxu0 0
  %1064 = vmatpush1.bf16.msra.mxu0 0
  %1065 = vmatprep.subr.bf16.mxu0 0
  %1066 = vmatpush1.bf16.msra.mxu0 0
  %1067 = vmatprep.subr.bf16.mxu0 0
  %1068 = vmatpush1.bf16.msra.mxu0 0
  %1069 = vmatprep.subr.bf16.mxu0 0
  %1070 = vmatpush1.bf16.msra.mxu0 0
  %1071 = vmatprep.subr.bf16.mxu0 0
  %1072 = vmatpush1.bf16.msra.mxu0 0
  %1073 = vmatprep.subr.bf16.mxu0 0
  %1074 = vmatpush1.bf16.msra.mxu0 0
  %1075 = vmatprep.subr.bf16.mxu0 0
  %1076 = vmatpush1.bf16.msra.mxu0 0
  %1077 = vmatprep.subr.bf16.mxu0 0
  %1078 = vmatpush1.bf16.msra.mxu0 0
  %1079 = vmatprep.subr.bf16.mxu0 0
  %1080 = vmatpush1.bf16.msra.mxu0 0
  %1081 = vmatprep.subr.bf16.mxu0 0
  %1082 = vmatpush1.bf16.msra.mxu0 0
  %1083 = vmatprep.mubr.bf16.mxu0 0
  %1084 = vmatmul.mubr.bf16.gmra.mrb[0].mxu0 %v1049
  %v1085 = vpop.f32.mrb[0].mxu0
  %v1086 = vadd.f32 0.0, %v1085
  %v1087 = vpop.f32.mrb[0].mxu0
  %v1088 = vpop.f32.mrb[0].mxu0
  %v1089 = vpop.f32.mrb[0].mxu0
  %1090 = vdwg.mxu0
  %v1091 = vadd.f32 %v375, %v1086
  %1093 = vrot.lane.b32.xlu0 %v982, 32
  %v1094 = vpop.permute.xlu0 %1093
  %v1096 = vsel %vm247, %v1094, 0
  %1098 = vmatprep.subr.bf16.mxu0 0
  %1099 = vmatpush1.bf16.msra.mxu0 %v386
  %1100 = vmatprep.subr.bf16.mxu0 0
  %1101 = vmatpush1.bf16.msra.mxu0 %v387
  %1102 = vmatprep.subr.bf16.mxu0 0
  %1103 = vmatpush1.bf16.msra.mxu0 0
  %1104 = vmatprep.subr.bf16.mxu0 0
  %1105 = vmatpush1.bf16.msra.mxu0 0
  %1106 = vmatprep.subr.bf16.mxu0 0
  %1107 = vmatpush1.bf16.msra.mxu0 0
  %1108 = vmatprep.subr.bf16.mxu0 0
  %1109 = vmatpush1.bf16.msra.mxu0 0
  %1110 = vmatprep.subr.bf16.mxu0 0
  %1111 = vmatpush1.bf16.msra.mxu0 0
  %1112 = vmatprep.subr.bf16.mxu0 0
  %1113 = vmatpush1.bf16.msra.mxu0 0
  %1114 = vmatprep.subr.bf16.mxu0 0
  %1115 = vmatpush1.bf16.msra.mxu0 0
  %1116 = vmatprep.subr.bf16.mxu0 0
  %1117 = vmatpush1.bf16.msra.mxu0 0
  %1118 = vmatprep.subr.bf16.mxu0 0
  %1119 = vmatpush1.bf16.msra.mxu0 0
  %1120 = vmatprep.subr.bf16.mxu0 0
  %1121 = vmatpush1.bf16.msra.mxu0 0
  %1122 = vmatprep.subr.bf16.mxu0 0
  %1123 = vmatpush1.bf16.msra.mxu0 0
  %1124 = vmatprep.subr.bf16.mxu0 0
  %1125 = vmatpush1.bf16.msra.mxu0 0
  %1126 = vmatprep.subr.bf16.mxu0 0
  %1127 = vmatpush1.bf16.msra.mxu0 0
  %1128 = vmatprep.subr.bf16.mxu0 0
  %1129 = vmatpush1.bf16.msra.mxu0 0
  %1130 = vmatprep.mubr.bf16.mxu0 0
  %1131 = vmatmul.mubr.bf16.gmra.mrb[0].mxu0 %v1096
  %v1132 = vpop.f32.mrb[0].mxu0
  %v1133 = vadd.f32 0.0, %v1132
  %v1134 = vpop.f32.mrb[0].mxu0
  %v1135 = vpop.f32.mrb[0].mxu0
  %v1136 = vpop.f32.mrb[0].mxu0
  %1137 = vdwg.mxu0
  %v1138 = vadd.f32 %v1091, %v1133
  %v1139 = vtanh.pop %v1138
  %v1140 = vmul.f32 %v1139, 0.5
  %v1141 = vadd.f32 %v1140, 0.5
  %v1142 = vmul.f32 %v1141, %v975
  %1144 = vrot.lane.b32.xlu0 %v1139, 64
  %v1145 = vpop.permute.xlu0 %1144
  %v1147 = vmul.f32 %v1141, %v1145
  %1149 = vrot.lane.b32.xlu0 %v1147, 32
  %v1150 = vpop.permute.xlu0 %1149
  %v1152 = vadd.f32 %v1142, %v1150
  %v1153 = vtanh.pop %v1152
  %1155 = vrot.lane.b32.xlu0 %v1153, 64
  %v1156 = vpop.permute.xlu0 %1155
  %v1158 = vmul.f32 %v1141, %v1156
  %v1159 = vpack.c.bf16 %v1158, %v1158
  %1160 = vmatprep.subr.bf16.mxu0 0
  %1161 = vmatpush1.bf16.msra.mxu0 %v243
  %1162 = vmatprep.subr.bf16.mxu0 0
  %1163 = vmatpush1.bf16.msra.mxu0 %v244
  %1164 = vmatprep.subr.bf16.mxu0 0
  %1165 = vmatpush1.bf16.msra.mxu0 0
  %1166 = vmatprep.subr.bf16.mxu0 0
  %1167 = vmatpush1.bf16.msra.mxu0 0
  %1168 = vmatprep.subr.bf16.mxu0 0
  %1169 = vmatpush1.bf16.msra.mxu0 0
  %1170 = vmatprep.subr.bf16.mxu0 0
  %1171 = vmatpush1.bf16.msra.mxu0 0
  %1172 = vmatprep.subr.bf16.mxu0 0
  %1173 = vmatpush1.bf16.msra.mxu0 0
  %1174 = vmatprep.subr.bf16.mxu0 0
  %1175 = vmatpush1.bf16.msra.mxu0 0
  %1176 = vmatprep.subr.bf16.mxu0 0
  %1177 = vmatpush1.bf16.msra.mxu0 0
  %1178 = vmatprep.subr.bf16.mxu0 0
  %1179 = vmatpush1.bf16.msra.mxu0 0
  %1180 = vmatprep.subr.bf16.mxu0 0
  %1181 = vmatpush1.bf16.msra.mxu0 0
  %1182 = vmatprep.subr.bf16.mxu0 0
  %1183 = vmatpush1.bf16.msra.mxu0 0
  %1184 = vmatprep.subr.bf16.mxu0 0
  %1185 = vmatpush1.bf16.msra.mxu0 0
  %1186 = vmatprep.subr.bf16.mxu0 0
  %1187 = vmatpush1.bf16.msra.mxu0 0
  %1188 = vmatprep.subr.bf16.mxu0 0
  %1189 = vmatpush1.bf16.msra.mxu0 0
  %1190 = vmatprep.subr.bf16.mxu0 0
  %1191 = vmatpush1.bf16.msra.mxu0 0
  %1192 = vmatprep.mubr.bf16.mxu0 0
  %1193 = vmatmul.mubr.bf16.gmra.mrb[0].mxu0 %v1049
  %v1194 = vpop.f32.mrb[0].mxu0
  %v1195 = vadd.f32 0.0, %v1194
  %v1196 = vpop.f32.mrb[0].mxu0
  %v1197 = vpop.f32.mrb[0].mxu0
  %v1198 = vpop.f32.mrb[0].mxu0
  %1199 = vdwg.mxu0
  %v1200 = vadd.f32 %v151, %v1195
  %v1201 = vtanh.pop %v1200
  %v1202 = vmul.f32 %v1201, 0.5
  %v1203 = vadd.f32 %v1202, 0.5
  %v1204 = vmul.f32 %v1203, %v1037
  %1206 = vrot.lane.b32.xlu0 %v1201, 64
  %v1207 = vpop.permute.xlu0 %1206
  %v1209 = vmul.f32 %v1203, %v1207
  %1211 = vrot.lane.b32.xlu0 %v1209, 32
  %v1212 = vpop.permute.xlu0 %1211
  %v1214 = vadd.f32 %v1204, %v1212
  %v1215 = vtanh.pop %v1214
  %1217 = vrot.lane.b32.xlu0 %v1215, 64
  %v1218 = vpop.permute.xlu0 %1217
  %v1220 = vmul.f32 %v1203, %v1218
  %v1221 = vpack.c.bf16 %v1220, %v1220
  %1223 = vrot.lane.b32.xlu0 %v1221, 32
  %v1224 = vpop.permute.xlu0 %1223
  %v1226 = vsel %vm247, %v1224, 0
  %1228 = vmatprep.subr.bf16.mxu0 0
  %1229 = vmatpush1.bf16.msra.mxu0 %v324
  %1230 = vmatprep.subr.bf16.mxu0 0
  %1231 = vmatpush1.bf16.msra.mxu0 %v325
  %1232 = vmatprep.subr.bf16.mxu0 0
  %1233 = vmatpush1.bf16.msra.mxu0 0
  %1234 = vmatprep.subr.bf16.mxu0 0
  %1235 = vmatpush1.bf16.msra.mxu0 0
  %1236 = vmatprep.subr.bf16.mxu0 0
  %1237 = vmatpush1.bf16.msra.mxu0 0
  %1238 = vmatprep.subr.bf16.mxu0 0
  %1239 = vmatpush1.bf16.msra.mxu0 0
  %1240 = vmatprep.subr.bf16.mxu0 0
  %1241 = vmatpush1.bf16.msra.mxu0 0
  %1242 = vmatprep.subr.bf16.mxu0 0
  %1243 = vmatpush1.bf16.msra.mxu0 0
  %1244 = vmatprep.subr.bf16.mxu0 0
  %1245 = vmatpush1.bf16.msra.mxu0 0
  %1246 = vmatprep.subr.bf16.mxu0 0
  %1247 = vmatpush1.bf16.msra.mxu0 0
  %1248 = vmatprep.subr.bf16.mxu0 0
  %1249 = vmatpush1.bf16.msra.mxu0 0
  %1250 = vmatprep.subr.bf16.mxu0 0
  %1251 = vmatpush1.bf16.msra.mxu0 0
  %1252 = vmatprep.subr.bf16.mxu0 0
  %1253 = vmatpush1.bf16.msra.mxu0 0
  %1254 = vmatprep.subr.bf16.mxu0 0
  %1255 = vmatpush1.bf16.msra.mxu0 0
  %1256 = vmatprep.subr.bf16.mxu0 0
  %1257 = vmatpush1.bf16.msra.mxu0 0
  %1258 = vmatprep.subr.bf16.mxu0 0
  %1259 = vmatpush1.bf16.msra.mxu0 0
  %1260 = vmatprep.mubr.bf16.mxu0 0
  %1261 = vmatmul.mubr.bf16.gmra.mrb[0].mxu0 %v1226
  %v1262 = vpop.f32.mrb[0].mxu0
  %v1263 = vadd.f32 0.0, %v1262
  %v1264 = vpop.f32.mrb[0].mxu0
  %v1265 = vpop.f32.mrb[0].mxu0
  %v1266 = vpop.f32.mrb[0].mxu0
  %1267 = vdwg.mxu0
  %v1268 = vadd.f32 %v375, %v1263
  %1270 = vrot.lane.b32.xlu0 %v1159, 32
  %v1271 = vpop.permute.xlu0 %1270
  %v1273 = vsel %vm247, %v1271, 0
  %1275 = vmatprep.subr.bf16.mxu0 0
  %1276 = vmatpush1.bf16.msra.mxu0 %v386
  %1277 = vmatprep.subr.bf16.mxu0 0
  %1278 = vmatpush1.bf16.msra.mxu0 %v387
  %1279 = vmatprep.subr.bf16.mxu0 0
  %1280 = vmatpush1.bf16.msra.mxu0 0
  %1281 = vmatprep.subr.bf16.mxu0 0
  %1282 = vmatpush1.bf16.msra.mxu0 0
  %1283 = vmatprep.subr.bf16.mxu0 0
  %1284 = vmatpush1.bf16.msra.mxu0 0
  %1285 = vmatprep.subr.bf16.mxu0 0
  %1286 = vmatpush1.bf16.msra.mxu0 0
  %1287 = vmatprep.subr.bf16.mxu0 0
  %1288 = vmatpush1.bf16.msra.mxu0 0
  %1289 = vmatprep.subr.bf16.mxu0 0
  %1290 = vmatpush1.bf16.msra.mxu0 0
  %1291 = vmatprep.subr.bf16.mxu0 0
  %1292 = vmatpush1.bf16.msra.mxu0 0
  %1293 = vmatprep.subr.bf16.mxu0 0
  %1294 = vmatpush1.bf16.msra.mxu0 0
  %1295 = vmatprep.subr.bf16.mxu0 0
  %1296 = vmatpush1.bf16.msra.mxu0 0
  %1297 = vmatprep.subr.bf16.mxu0 0
  %1298 = vmatpush1.bf16.msra.mxu0 0
  %1299 = vmatprep.subr.bf16.mxu0 0
  %1300 = vmatpush1.bf16.msra.mxu0 0
  %1301 = vmatprep.subr.bf16.mxu0 0
  %1302 = vmatpush1.bf16.msra.mxu0 0
  %1303 = vmatprep.subr.bf16.mxu0 0
  %1304 = vmatpush1.bf16.msra.mxu0 0
  %1305 = vmatprep.subr.bf16.mxu0 0
  %1306 = vmatpush1.bf16.msra.mxu0 0
  %1307 = vmatprep.mubr.bf16.mxu0 0
  %1308 = vmatmul.mubr.bf16.gmra.mrb[0].mxu0 %v1273
  %v1309 = vpop.f32.mrb[0].mxu0
  %v1310 = vadd.f32 0.0, %v1309
  %v1311 = vpop.f32.mrb[0].mxu0
  %v1312 = vpop.f32.mrb[0].mxu0
  %v1313 = vpop.f32.mrb[0].mxu0
  %1314 = vdwg.mxu0
  %v1315 = vadd.f32 %v1268, %v1310
  %v1316 = vtanh.pop %v1315
  %v1317 = vmul.f32 %v1316, 0.5
  %v1318 = vadd.f32 %v1317, 0.5
  %v1319 = vmul.f32 %v1318, %v1152
  %1321 = vrot.lane.b32.xlu0 %v1316, 64
  %v1322 = vpop.permute.xlu0 %1321
  %v1324 = vmul.f32 %v1318, %v1322
  %1326 = vrot.lane.b32.xlu0 %v1324, 32
  %v1327 = vpop.permute.xlu0 %1326
  %v1329 = vadd.f32 %v1319, %v1327
  %v1330 = vtanh.pop %v1329
  %1332 = vrot.lane.b32.xlu0 %v1330, 64
  %v1333 = vpop.permute.xlu0 %1332
  %v1335 = vmul.f32 %v1318, %v1333
  %v1336 = vpack.c.bf16 %v1335, %v1335
  %1337 = vmatprep.subr.bf16.mxu0 0
  %1338 = vmatpush1.bf16.msra.mxu0 %v243
  %1339 = vmatprep.subr.bf16.mxu0 0
  %1340 = vmatpush1.bf16.msra.mxu0 %v244
  %1341 = vmatprep.subr.bf16.mxu0 0
  %1342 = vmatpush1.bf16.msra.mxu0 0
  %1343 = vmatprep.subr.bf16.mxu0 0
  %1344 = vmatpush1.bf16.msra.mxu0 0
  %1345 = vmatprep.subr.bf16.mxu0 0
  %1346 = vmatpush1.bf16.msra.mxu0 0
  %1347 = vmatprep.subr.bf16.mxu0 0
  %1348 = vmatpush1.bf16.msra.mxu0 0
  %1349 = vmatprep.subr.bf16.mxu0 0
  %1350 = vmatpush1.bf16.msra.mxu0 0
  %1351 = vmatprep.subr.bf16.mxu0 0
  %1352 = vmatpush1.bf16.msra.mxu0 0
  %1353 = vmatprep.subr.bf16.mxu0 0
  %1354 = vmatpush1.bf16.msra.mxu0 0
  %1355 = vmatprep.subr.bf16.mxu0 0
  %1356 = vmatpush1.bf16.msra.mxu0 0
  %1357 = vmatprep.subr.bf16.mxu0 0
  %1358 = vmatpush1.bf16.msra.mxu0 0
  %1359 = vmatprep.subr.bf16.mxu0 0
  %1360 = vmatpush1.bf16.msra.mxu0 0
  %1361 = vmatprep.subr.bf16.mxu0 0
  %1362 = vmatpush1.bf16.msra.mxu0 0
  %1363 = vmatprep.subr.bf16.mxu0 0
  %1364 = vmatpush1.bf16.msra.mxu0 0
  %1365 = vmatprep.subr.bf16.mxu0 0
  %1366 = vmatpush1.bf16.msra.mxu0 0
  %1367 = vmatprep.subr.bf16.mxu0 0
  %1368 = vmatpush1.bf16.msra.mxu0 0
  %1369 = vmatprep.mubr.bf16.mxu0 0
  %1370 = vmatmul.mubr.bf16.gmra.mrb[0].mxu0 %v1226
  %v1371 = vpop.f32.mrb[0].mxu0
  %v1372 = vadd.f32 0.0, %v1371
  %v1373 = vpop.f32.mrb[0].mxu0
  %v1374 = vpop.f32.mrb[0].mxu0
  %v1375 = vpop.f32.mrb[0].mxu0
  %1376 = vdwg.mxu0
  %v1377 = vadd.f32 %v156, %v1372
  %v1378 = vtanh.pop %v1377
  %v1379 = vmul.f32 %v1378, 0.5
  %v1380 = vadd.f32 %v1379, 0.5
  %v1381 = vmul.f32 %v1380, %v1214
  %1383 = vrot.lane.b32.xlu0 %v1378, 64
  %v1384 = vpop.permute.xlu0 %1383
  %v1386 = vmul.f32 %v1380, %v1384
  %1388 = vrot.lane.b32.xlu0 %v1386, 32
  %v1389 = vpop.permute.xlu0 %1388
  %v1391 = vadd.f32 %v1381, %v1389
  %v1392 = vtanh.pop %v1391
  %1394 = vrot.lane.b32.xlu0 %v1392, 64
  %v1395 = vpop.permute.xlu0 %1394
  %v1397 = vmul.f32 %v1380, %v1395
  %v1398 = vpack.c.bf16 %v1397, %v1397
  %1400 = vrot.lane.b32.xlu0 %v1398, 32
  %v1401 = vpop.permute.xlu0 %1400
  %v1403 = vsel %vm247, %v1401, 0
  %1405 = vmatprep.subr.bf16.mxu0 0
  %1406 = vmatpush1.bf16.msra.mxu0 %v324
  %1407 = vmatprep.subr.bf16.mxu0 0
  %1408 = vmatpush1.bf16.msra.mxu0 %v325
  %1409 = vmatprep.subr.bf16.mxu0 0
  %1410 = vmatpush1.bf16.msra.mxu0 0
  %1411 = vmatprep.subr.bf16.mxu0 0
  %1412 = vmatpush1.bf16.msra.mxu0 0
  %1413 = vmatprep.subr.bf16.mxu0 0
  %1414 = vmatpush1.bf16.msra.mxu0 0
  %1415 = vmatprep.subr.bf16.mxu0 0
  %1416 = vmatpush1.bf16.msra.mxu0 0
  %1417 = vmatprep.subr.bf16.mxu0 0
  %1418 = vmatpush1.bf16.msra.mxu0 0
  %1419 = vmatprep.subr.bf16.mxu0 0
  %1420 = vmatpush1.bf16.msra.mxu0 0
  %1421 = vmatprep.subr.bf16.mxu0 0
  %1422 = vmatpush1.bf16.msra.mxu0 0
  %1423 = vmatprep.subr.bf16.mxu0 0
  %1424 = vmatpush1.bf16.msra.mxu0 0
  %1425 = vmatprep.subr.bf16.mxu0 0
  %1426 = vmatpush1.bf16.msra.mxu0 0
  %1427 = vmatprep.subr.bf16.mxu0 0
  %1428 = vmatpush1.bf16.msra.mxu0 0
  %1429 = vmatprep.subr.bf16.mxu0 0
  %1430 = vmatpush1.bf16.msra.mxu0 0
  %1431 = vmatprep.subr.bf16.mxu0 0
  %1432 = vmatpush1.bf16.msra.mxu0 0
  %1433 = vmatprep.subr.bf16.mxu0 0
  %1434 = vmatpush1.bf16.msra.mxu0 0
  %1435 = vmatprep.subr.bf16.mxu0 0
  %1436 = vmatpush1.bf16.msra.mxu0 0
  %1437 = vmatprep.mubr.bf16.mxu0 0
  %1438 = vmatmul.mubr.bf16.gmra.mrb[0].mxu0 %v1403
  %v1439 = vpop.f32.mrb[0].mxu0
  %v1440 = vadd.f32 0.0, %v1439
  %v1441 = vpop.f32.mrb[0].mxu0
  %v1442 = vpop.f32.mrb[0].mxu0
  %v1443 = vpop.f32.mrb[0].mxu0
  %1444 = vdwg.mxu0
  %v1445 = vadd.f32 %v375, %v1440
  %1447 = vrot.lane.b32.xlu0 %v1336, 32
  %v1448 = vpop.permute.xlu0 %1447
  %v1450 = vsel %vm247, %v1448, 0
  %1452 = vmatprep.subr.bf16.mxu0 0
  %1453 = vmatpush1.bf16.msra.mxu0 %v386
  %1454 = vmatprep.subr.bf16.mxu0 0
  %1455 = vmatpush1.bf16.msra.mxu0 %v387
  %1456 = vmatprep.subr.bf16.mxu0 0
  %1457 = vmatpush1.bf16.msra.mxu0 0
  %1458 = vmatprep.subr.bf16.mxu0 0
  %1459 = vmatpush1.bf16.msra.mxu0 0
  %1460 = vmatprep.subr.bf16.mxu0 0
  %1461 = vmatpush1.bf16.msra.mxu0 0
  %1462 = vmatprep.subr.bf16.mxu0 0
  %1463 = vmatpush1.bf16.msra.mxu0 0
  %1464 = vmatprep.subr.bf16.mxu0 0
  %1465 = vmatpush1.bf16.msra.mxu0 0
  %1466 = vmatprep.subr.bf16.mxu0 0
  %1467 = vmatpush1.bf16.msra.mxu0 0
  %1468 = vmatprep.subr.bf16.mxu0 0
  %1469 = vmatpush1.bf16.msra.mxu0 0
  %1470 = vmatprep.subr.bf16.mxu0 0
  %1471 = vmatpush1.bf16.msra.mxu0 0
  %1472 = vmatprep.subr.bf16.mxu0 0
  %1473 = vmatpush1.bf16.msra.mxu0 0
  %1474 = vmatprep.subr.bf16.mxu0 0
  %1475 = vmatpush1.bf16.msra.mxu0 0
  %1476 = vmatprep.subr.bf16.mxu0 0
  %1477 = vmatpush1.bf16.msra.mxu0 0
  %1478 = vmatprep.subr.bf16.mxu0 0
  %1479 = vmatpush1.bf16.msra.mxu0 0
  %1480 = vmatprep.subr.bf16.mxu0 0
  %1481 = vmatpush1.bf16.msra.mxu0 0
  %1482 = vmatprep.subr.bf16.mxu0 0
  %1483 = vmatpush1.bf16.msra.mxu0 0
  %1484 = vmatprep.mubr.bf16.mxu0 0
  %1485 = vmatmul.mubr.bf16.gmra.mrb[0].mxu0 %v1450
  %v1486 = vpop.f32.mrb[0].mxu0
  %v1487 = vadd.f32 0.0, %v1486
  %v1488 = vpop.f32.mrb[0].mxu0
  %v1489 = vpop.f32.mrb[0].mxu0
  %v1490 = vpop.f32.mrb[0].mxu0
  %1491 = vdwg.mxu0
  %v1492 = vadd.f32 %v1445, %v1487
  %v1493 = vtanh.pop %v1492
  %v1494 = vmul.f32 %v1493, 0.5
  %v1495 = vadd.f32 %v1494, 0.5
  %v1496 = vmul.f32 %v1495, %v1329
  %1498 = vrot.lane.b32.xlu0 %v1493, 64
  %v1499 = vpop.permute.xlu0 %1498
  %v1501 = vmul.f32 %v1495, %v1499
  %1503 = vrot.lane.b32.xlu0 %v1501, 32
  %v1504 = vpop.permute.xlu0 %1503
  %v1506 = vadd.f32 %v1496, %v1504
  %v1507 = vtanh.pop %v1506
  %1509 = vrot.lane.b32.xlu0 %v1507, 64
  %v1510 = vpop.permute.xlu0 %1509
  %v1512 = vmul.f32 %v1495, %v1510
  %v1513 = vpack.c.bf16 %v1512, %v1512
  %1514 = vmatprep.subr.bf16.mxu0 0
  %1515 = vmatpush1.bf16.msra.mxu0 %v243
  %1516 = vmatprep.subr.bf16.mxu0 0
  %1517 = vmatpush1.bf16.msra.mxu0 %v244
  %1518 = vmatprep.subr.bf16.mxu0 0
  %1519 = vmatpush1.bf16.msra.mxu0 0
  %1520 = vmatprep.subr.bf16.mxu0 0
  %1521 = vmatpush1.bf16.msra.mxu0 0
  %1522 = vmatprep.subr.bf16.mxu0 0
  %1523 = vmatpush1.bf16.msra.mxu0 0
  %1524 = vmatprep.subr.bf16.mxu0 0
  %1525 = vmatpush1.bf16.msra.mxu0 0
  %1526 = vmatprep.subr.bf16.mxu0 0
  %1527 = vmatpush1.bf16.msra.mxu0 0
  %1528 = vmatprep.subr.bf16.mxu0 0
  %1529 = vmatpush1.bf16.msra.mxu0 0
  %1530 = vmatprep.subr.bf16.mxu0 0
  %1531 = vmatpush1.bf16.msra.mxu0 0
  %1532 = vmatprep.subr.bf16.mxu0 0
  %1533 = vmatpush1.bf16.msra.mxu0 0
  %1534 = vmatprep.subr.bf16.mxu0 0
  %1535 = vmatpush1.bf16.msra.mxu0 0
  %1536 = vmatprep.subr.bf16.mxu0 0
  %1537 = vmatpush1.bf16.msra.mxu0 0
  %1538 = vmatprep.subr.bf16.mxu0 0
  %1539 = vmatpush1.bf16.msra.mxu0 0
  %1540 = vmatprep.subr.bf16.mxu0 0
  %1541 = vmatpush1.bf16.msra.mxu0 0
  %1542 = vmatprep.subr.bf16.mxu0 0
  %1543 = vmatpush1.bf16.msra.mxu0 0
  %1544 = vmatprep.subr.bf16.mxu0 0
  %1545 = vmatpush1.bf16.msra.mxu0 0
  %1546 = vmatprep.mubr.bf16.mxu0 0
  %1547 = vmatmul.mubr.bf16.gmra.mrb[0].mxu0 %v1403
  %v1548 = vpop.f32.mrb[0].mxu0
  %v1549 = vadd.f32 0.0, %v1548
  %v1550 = vpop.f32.mrb[0].mxu0
  %v1551 = vpop.f32.mrb[0].mxu0
  %v1552 = vpop.f32.mrb[0].mxu0
  %1553 = vdwg.mxu0
  %v1554 = vadd.f32 %v159, %v1549
  %v1555 = vtanh.pop %v1554
  %v1556 = vmul.f32 %v1555, 0.5
  %v1557 = vadd.f32 %v1556, 0.5
  %v1558 = vmul.f32 %v1557, %v1391
  %1560 = vrot.lane.b32.xlu0 %v1555, 64
  %v1561 = vpop.permute.xlu0 %1560
  %v1563 = vmul.f32 %v1557, %v1561
  %1565 = vrot.lane.b32.xlu0 %v1563, 32
  %v1566 = vpop.permute.xlu0 %1565
  %v1568 = vadd.f32 %v1558, %v1566
  %v1569 = vtanh.pop %v1568
  %1571 = vrot.lane.b32.xlu0 %v1569, 64
  %v1572 = vpop.permute.xlu0 %1571
  %v1574 = vmul.f32 %v1557, %v1572
  %v1575 = vpack.c.bf16 %v1574, %v1574
  %1577 = vrot.lane.b32.xlu0 %v1575, 32
  %v1578 = vpop.permute.xlu0 %1577
  %v1580 = vsel %vm247, %v1578, 0
  %1582 = vmatprep.subr.bf16.mxu0 0
  %1583 = vmatpush1.bf16.msra.mxu0 %v324
  %1584 = vmatprep.subr.bf16.mxu0 0
  %1585 = vmatpush1.bf16.msra.mxu0 %v325
  %1586 = vmatprep.subr.bf16.mxu0 0
  %1587 = vmatpush1.bf16.msra.mxu0 0
  %1588 = vmatprep.subr.bf16.mxu0 0
  %1589 = vmatpush1.bf16.msra.mxu0 0
  %1590 = vmatprep.subr.bf16.mxu0 0
  %1591 = vmatpush1.bf16.msra.mxu0 0
  %1592 = vmatprep.subr.bf16.mxu0 0
  %1593 = vmatpush1.bf16.msra.mxu0 0
  %1594 = vmatprep.subr.bf16.mxu0 0
  %1595 = vmatpush1.bf16.msra.mxu0 0
  %1596 = vmatprep.subr.bf16.mxu0 0
  %1597 = vmatpush1.bf16.msra.mxu0 0
  %1598 = vmatprep.subr.bf16.mxu0 0
  %1599 = vmatpush1.bf16.msra.mxu0 0
  %1600 = vmatprep.subr.bf16.mxu0 0
  %1601 = vmatpush1.bf16.msra.mxu0 0
  %1602 = vmatprep.subr.bf16.mxu0 0
  %1603 = vmatpush1.bf16.msra.mxu0 0
  %1604 = vmatprep.subr.bf16.mxu0 0
  %1605 = vmatpush1.bf16.msra.mxu0 0
  %1606 = vmatprep.subr.bf16.mxu0 0
  %1607 = vmatpush1.bf16.msra.mxu0 0
  %1608 = vmatprep.subr.bf16.mxu0 0
  %1609 = vmatpush1.bf16.msra.mxu0 0
  %1610 = vmatprep.subr.bf16.mxu0 0
  %1611 = vmatpush1.bf16.msra.mxu0 0
  %1612 = vmatprep.subr.bf16.mxu0 0
  %1613 = vmatpush1.bf16.msra.mxu0 0
  %1614 = vmatprep.mubr.bf16.mxu0 0
  %1615 = vmatmul.mubr.bf16.gmra.mrb[0].mxu0 %v1580
  %v1616 = vpop.f32.mrb[0].mxu0
  %v1617 = vadd.f32 0.0, %v1616
  %v1618 = vpop.f32.mrb[0].mxu0
  %v1619 = vpop.f32.mrb[0].mxu0
  %v1620 = vpop.f32.mrb[0].mxu0
  %1621 = vdwg.mxu0
  %v1622 = vadd.f32 %v375, %v1617
  %1624 = vrot.lane.b32.xlu0 %v1513, 32
  %v1625 = vpop.permute.xlu0 %1624
  %v1627 = vsel %vm247, %v1625, 0
  %1629 = vmatprep.subr.bf16.mxu0 0
  %1630 = vmatpush1.bf16.msra.mxu0 %v386
  %1631 = vmatprep.subr.bf16.mxu0 0
  %1632 = vmatpush1.bf16.msra.mxu0 %v387
  %1633 = vmatprep.subr.bf16.mxu0 0
  %1634 = vmatpush1.bf16.msra.mxu0 0
  %1635 = vmatprep.subr.bf16.mxu0 0
  %1636 = vmatpush1.bf16.msra.mxu0 0
  %1637 = vmatprep.subr.bf16.mxu0 0
  %1638 = vmatpush1.bf16.msra.mxu0 0
  %1639 = vmatprep.subr.bf16.mxu0 0
  %1640 = vmatpush1.bf16.msra.mxu0 0
  %1641 = vmatprep.subr.bf16.mxu0 0
  %1642 = vmatpush1.bf16.msra.mxu0 0
  %1643 = vmatprep.subr.bf16.mxu0 0
  %1644 = vmatpush1.bf16.msra.mxu0 0
  %1645 = vmatprep.subr.bf16.mxu0 0
  %1646 = vmatpush1.bf16.msra.mxu0 0
  %1647 = vmatprep.subr.bf16.mxu0 0
  %1648 = vmatpush1.bf16.msra.mxu0 0
  %1649 = vmatprep.subr.bf16.mxu0 0
  %1650 = vmatpush1.bf16.msra.mxu0 0
  %1651 = vmatprep.subr.bf16.mxu0 0
  %1652 = vmatpush1.bf16.msra.mxu0 0
  %1653 = vmatprep.subr.bf16.mxu0 0
  %1654 = vmatpush1.bf16.msra.mxu0 0
  %1655 = vmatprep.subr.bf16.mxu0 0
  %1656 = vmatpush1.bf16.msra.mxu0 0
  %1657 = vmatprep.subr.bf16.mxu0 0
  %1658 = vmatpush1.bf16.msra.mxu0 0
  %1659 = vmatprep.subr.bf16.mxu0 0
  %1660 = vmatpush1.bf16.msra.mxu0 0
  %1661 = vmatprep.mubr.bf16.mxu0 0
  %1662 = vmatmul.mubr.bf16.gmra.mrb[0].mxu0 %v1627
  %v1663 = vpop.f32.mrb[0].mxu0
  %v1664 = vadd.f32 0.0, %v1663
  %v1665 = vpop.f32.mrb[0].mxu0
  %v1666 = vpop.f32.mrb[0].mxu0
  %v1667 = vpop.f32.mrb[0].mxu0
  %1668 = vdwg.mxu0
  %v1669 = vadd.f32 %v1622, %v1664
  %v1670 = vtanh.pop %v1669
  %v1671 = vmul.f32 %v1670, 0.5
  %v1672 = vadd.f32 %v1671, 0.5
  %v1673 = vmul.f32 %v1672, %v1506
  %1675 = vrot.lane.b32.xlu0 %v1670, 64
  %v1676 = vpop.permute.xlu0 %1675
  %v1678 = vmul.f32 %v1672, %v1676
  %1680 = vrot.lane.b32.xlu0 %v1678, 32
  %v1681 = vpop.permute.xlu0 %1680
  %v1683 = vadd.f32 %v1673, %v1681
  %v1684 = vtanh.pop %v1683
  %1686 = vrot.lane.b32.xlu0 %v1684, 64
  %v1687 = vpop.permute.xlu0 %1686
  %v1689 = vmul.f32 %v1672, %v1687
  %v1690 = vpack.c.bf16 %v1689, %v1689
  %v1691 = vld [vmem:[%s7] sm:$0xf]
  %v1692 = vld [vmem:[%s7 + $0x4] sm:$0xf]
  %v1693 = vld [vmem:[%s7 + $0x8] sm:$0xf]
  %v1694 = vld [vmem:[%s7 + $0xc] sm:$0xf]
  %1696 = vrot.lane.b32.xlu0 %v1690, 32
  %v1697 = vpop.permute.xlu0 %1696
  %v1702 = vunpack.c.l.b16 %v1691
  %v1703 = vunpack.c.l.b16 %v1692
  %v1704 = vunpack.c.l.b16 %v1693
  %v1705 = vunpack.c.l.b16 %v1694
  %v1706 = vpack.c.b16 %v1703, %v1702
  %v1707 = vpack.c.b16 %v1705, %v1704
  %v1711 = vsel %vm247, %v1697, 0
  %1713 = vmatprep.subr.bf16.mxu0 0
  %1714 = vmatpush1.bf16.msra.mxu0 %v1706
  %1715 = vmatprep.subr.bf16.mxu0 0
  %1716 = vmatpush1.bf16.msra.mxu0 %v1707
  %1717 = vmatprep.subr.bf16.mxu0 0
  %1718 = vmatpush1.bf16.msra.mxu0 0
  %1719 = vmatprep.subr.bf16.mxu0 0
  %1720 = vmatpush1.bf16.msra.mxu0 0
  %1721 = vmatprep.subr.bf16.mxu0 0
  %1722 = vmatpush1.bf16.msra.mxu0 0
  %1723 = vmatprep.subr.bf16.mxu0 0
  %1724 = vmatpush1.bf16.msra.mxu0 0
  %1725 = vmatprep.subr.bf16.mxu0 0
  %1726 = vmatpush1.bf16.msra.mxu0 0
  %1727 = vmatprep.subr.bf16.mxu0 0
  %1728 = vmatpush1.bf16.msra.mxu0 0
  %1729 = vmatprep.subr.bf16.mxu0 0
  %1730 = vmatpush1.bf16.msra.mxu0 0
  %1731 = vmatprep.subr.bf16.mxu0 0
  %1732 = vmatpush1.bf16.msra.mxu0 0
  %1733 = vmatprep.subr.bf16.mxu0 0
  %1734 = vmatpush1.bf16.msra.mxu0 0
  %1735 = vmatprep.subr.bf16.mxu0 0
  %1736 = vmatpush1.bf16.msra.mxu0 0
  %1737 = vmatprep.subr.bf16.mxu0 0
  %1738 = vmatpush1.bf16.msra.mxu0 0
  %1739 = vmatprep.subr.bf16.mxu0 0
  %1740 = vmatpush1.bf16.msra.mxu0 0
  %1741 = vmatprep.subr.bf16.mxu0 0
  %1742 = vmatpush1.bf16.msra.mxu0 0
  %1743 = vmatprep.subr.bf16.mxu0 0
  %1744 = vmatpush1.bf16.msra.mxu0 0
  %1745 = vmatprep.mubr.bf16.mxu0 0
  %1746 = vmatmul.mubr.bf16.gmra.mrb[0].mxu0 %v1711
  %v1747 = vpop.f32.mrb[0].mxu0
  %v1748 = vadd.f32 %v217, %v1747
  %v1749 = vpop.f32.mrb[0].mxu0
  %v1750 = vpop.f32.mrb[0].mxu0
  %v1751 = vpop.f32.mrb[0].mxu0
  %1752 = vdwg.mxu0
  %vm1753 = vcmask 7168
  %1754 = vst.msk [vmem:[%s10] sm:$0xff] %vm1753, %v1748
  // Predicated region
  $region42: #{tpu_custom_call.1} parent=0 // pred_check
    _
  $region43: #{tpu_custom_call.1} parent=0 // pred_check_branch
    %1756 = sbr.rel (0) target = $region45
  $region44: #{tpu_custom_call.1} parent=0 // pred_region
    _
  $region45: #{tpu_custom_call.1} parent=0 // pred_fallthru
    _
  // Predicated region
  $region46: #{tpu_custom_call.1} parent=0 // pred_check
    _
  $region47: #{tpu_custom_call.1} parent=0 // pred_check_branch
    %1758 = sbr.rel (0) target = $region49
  $region48: #{tpu_custom_call.1} parent=0 // pred_region
    _
  $region49: #{tpu_custom_call.1} parent=0 // pred_fallthru
    _

</llo_original>
